<compile_context>
chip_gen: v7x
topology: tpu7x:2x2x1
jax: 0.10.0
libtpu: 0.0.40
codegen_flags: <defaults>
</compile_context>

<pallas_src>
import functools

import jax
import jax.numpy as jnp
from jax.experimental import pallas as pl
from jax.experimental.pallas import tpu as pltpu

EPS = 1e-5
_VMEM = pl.BlockSpec(memory_space=pltpu.MemorySpace.VMEM)


def _bn_act(x, gamma, beta, inv_count, relu6):
    """Training-mode BatchNorm (batch stats, biased var) + optional ReLU6.

    x: (C, L) with the reduction axis on lanes; gamma/beta: (C, 1).
    Centered two-pass statistics for accuracy; rsqrt goes to the EUP slot.
    """
    mean = jnp.sum(x, axis=1, keepdims=True) * inv_count
    xc = x - mean
    var = jnp.sum(xc * xc, axis=1, keepdims=True) * inv_count
    y = xc * (gamma * jax.lax.rsqrt(var + EPS)) + beta
    return jnp.clip(y, 0.0, 6.0) if relu6 else y


def _inverted_residual_kernel(
        # inputs (full arrays in VMEM)
        x_ref,                       # (N, Cin, H*W) f32  (NCHW, spatial flattened)
        rc_ref,                      # (2, N*H*W) int32   [row; col] of each position
        wexp_ref, g1_ref, b1_ref,    # (hid, Cin) f32, (hid, 1), (hid, 1)
        wdw_ref, g2_ref, b2_ref,     # (hid, K*K) f32, (hid, 1), (hid, 1)
        wpw_ref, g3_ref, b3_ref,     # (Cout, hid) f32, (Cout, 1), (Cout, 1)
        # output
        o_ref,                       # (N, Cout, Ho*Wo) f32 (lane-dense stores)
        # scratch
        h_ref,                       # (hid, base + N*H*W + halo_r) f32
        *, N, H, W, Ho, Wo, K, pad, stride, hid, cin,
        expand, use_res, h_base, mm_dtype):
    M = H * W
    Mo = Ho * Wo
    NM = N * M
    NMo = N * Mo
    base = h_base
    wbuf = h_ref.shape[1]

    # ---- Input gather: (N, Cin, M) -> (Cin, N*M).  Aligned lane-tile copies. ----
    xt = jnp.concatenate([x_ref[n] for n in range(N)], axis=1)       # (Cin, NM)

    # ---- Stage 1: 1x1 expansion + BN1 + ReLU6 (single batched pass) ------------
    if expand:
        w1 = wexp_ref[...]                                           # (hid, Cin)
        if cin <= 16:
            # Tiny contraction depth: VPU broadcast-FMAs beat a nearly empty MXU pass.
            hraw = w1[:, 0:1] * xt[0:1, :]
            for c in range(1, cin):
                hraw = hraw + w1[:, c:c + 1] * xt[c:c + 1, :]
        else:
            # Production widths: single batched MXU dot, (hid,Cin) x (Cin, N*M).
            hraw = jax.lax.dot_general(
                w1.astype(mm_dtype), xt.astype(mm_dtype),
                (((1,), (0,)), ((), ())), preferred_element_type=jnp.float32)
        h = _bn_act(hraw, g1_ref[...], b1_ref[...], 1.0 / NM, relu6=True)
    else:
        h = xt                                                       # hid == Cin

    # ---- Stage 2 prep: store hidden once; zero only the tiny halo strips -------
    if base > 0:
        h_ref[:, 0:base] = jnp.zeros((hid, base), jnp.float32)
    if wbuf > base + NM:
        h_ref[:, base + NM:wbuf] = jnp.zeros((hid, wbuf - base - NM), jnp.float32)
    h_ref[:, base:base + NM] = h                                     # aligned store

    # ---- Stage 2: depthwise KxK as K*K shifted-window FMAs on (hid, N*M) -------
    # Output pixel (i, j) of image n reads hidden pixel (i+kh-pad, j+kw-pad); in the
    # flattened layout that is a constant lane offset (kh-pad)*W + (kw-pad).  Out-of
    # image reads (halo / neighbouring image) are masked to zero per tap.
    row = rc_ref[0:1, :]                                             # (1, NM) int32
    col = rc_ref[1:2, :]
    wdw = wdw_ref[...]                                               # (hid, K*K)
    acc = jnp.zeros((hid, NM), jnp.float32)
    for kh in range(K):
        for kw in range(K):
            dh, dw_ = kh - pad, kw - pad
            s0 = base + dh * W + dw_
            win = h_ref[:, s0:s0 + NM]                               # offset vld
            checks = []
            if dh < 0:
                checks.append(row >= -dh)
            if dh > 0:
                checks.append(row < H - dh)
            if dw_ < 0:
                checks.append(col >= -dw_)
            if dw_ > 0:
                checks.append(col < W - dw_)
            if checks:
                valid = checks[0]
                for chk in checks[1:]:
                    valid = valid & chk
                win = jnp.where(valid, win, 0.0)
            t = kh * K + kw
            acc = acc + win * wdw[:, t:t + 1]

    if stride == 1 and Ho == H and Wo == W:
        dwv = acc                                                    # fast path
    else:
        # TODO(synk): correctness-only fallback for strided / non-"same" depthwise.
        cols = []
        for n in range(N):
            rn = acc[:, n * M:(n + 1) * M].reshape(hid, H, W)
            rn = rn[:, 0:(Ho - 1) * stride + 1:stride,
                       0:(Wo - 1) * stride + 1:stride]
            cols.append(rn.reshape(hid, Mo))
        dwv = jnp.concatenate(cols, axis=1)                          # (hid, N*Mo)

    # ---- Stage 3: BN2 + ReLU6 -> 1x1 pointwise (MXU) -> BN3 (all batched) ------
    d = _bn_act(dwv, g2_ref[...], b2_ref[...], 1.0 / NMo, relu6=True)
    out = jax.lax.dot_general(
        wpw_ref[...].astype(mm_dtype), d.astype(mm_dtype),
        (((1,), (0,)), ((), ())), preferred_element_type=jnp.float32)  # (Cout, NMo)
    out = _bn_act(out, g3_ref[...], b3_ref[...], 1.0 / NMo, relu6=False)

    # ---- Stage 4: (+residual) and per-image lane-dense (256-wide) stores -------
    for n in range(N):
        on = out[:, n * Mo:(n + 1) * Mo]
        if use_res:
            on = on + x_ref[n]                                       # (Cout, Mo)
        o_ref[n] = on


def _vmem_limit_bytes():
    """Portable VMEM budget derived from the chip (not hard-coded)."""
    try:
        info = pltpu.get_tpu_info()
        cap = getattr(info, "vmem_capacity_bytes", None)
        if cap:
            return int(min(cap * 3 // 4, 100 * 1024 * 1024))
    except Exception:
        pass
    return 64 * 1024 * 1024


def inverted_residual(x_nchw, params, *, kernel_size, padding, stride,
                      expand_ratio, matmul_dtype=jnp.float32):
    """Forward of the PyTorch InvertedResidual block (NCHW in, NCHW out)."""
    N, Cin, H, W = x_nchw.shape
    hid = round(Cin * expand_ratio)
    Cout = params["w_pw"].shape[0]
    K, pad = kernel_size, padding
    Ho = (H + 2 * pad - K) // stride + 1
    Wo = (W + 2 * pad - K) // stride + 1
    use_res = (stride == 1) and (Cin == Cout)
    expand = expand_ratio != 1

    # Halo sizes for the flattened shifted-window depthwise (kernel Stage 2).
    halo_l = pad * (W + 1)
    base = ((halo_l + 127) // 128) * 128 if halo_l > 0 else 0  # keep main store aligned
    halo_r = max(0, K - 1 - pad) * (W + 1)
    wbuf = base + N * H * W + halo_r

    # Contiguous reshape only (NCHW row-major kept): no wrapper transposes.
    x2 = x_nchw.reshape(N, Cin, H * W).astype(jnp.float32)

    # Per-position (row, col) index metadata for the depthwise boundary masks
    # (passed in to avoid in-kernel integer div/mod on vectors).
    m_idx = jnp.arange(H * W, dtype=jnp.int32)
    rc = jnp.stack([m_idx // W, m_idx % W], axis=0)                  # (2, H*W)
    rc = jnp.tile(rc, (1, N))                                        # (2, N*H*W)

    kern = functools.partial(
        _inverted_residual_kernel,
        N=N, H=H, W=W, Ho=Ho, Wo=Wo, K=K, pad=pad, stride=stride,
        hid=hid, cin=Cin, expand=expand, use_res=use_res, h_base=base,
        mm_dtype=matmul_dtype)

    out = pl.pallas_call(
        kern,
        out_shape=jax.ShapeDtypeStruct((N, Cout, Ho * Wo), jnp.float32),
        in_specs=[_VMEM] * 11,
        out_specs=_VMEM,
        scratch_shapes=[pltpu.VMEM((hid, wbuf), jnp.float32)],   # only scratch (~73 KB)
        compiler_params=pltpu.CompilerParams(vmem_limit_bytes=_vmem_limit_bytes()),
    )(x2, rc,
      params["w_exp"], params["g_exp"], params["b_exp"],
      params["w_dw"], params["g_dw"], params["b_dw"],
      params["w_pw"], params["g_pw"], params["b_pw"])

    return out.reshape(N, Cout, Ho, Wo)      # contiguous split of the last dim (free)


def make_params(key, C_in, C_out, kernel_size, expand_ratio):
    """Weights in PyTorch-native layouts (squeezed 1x1 dims), no transposes."""
    hid = round(C_in * expand_ratio)
    K = kernel_size
    k1, k2, k3 = jax.random.split(key, 3)
    return {
        "w_exp": 0.1 * jax.random.normal(k1, (hid, C_in), jnp.float32),   # (hid,Cin,1,1)
        "g_exp": jnp.ones((hid, 1), jnp.float32),
        "b_exp": jnp.zeros((hid, 1), jnp.float32),
        "w_dw": 0.1 * jax.random.normal(k2, (hid, K * K), jnp.float32),   # (hid,1,K,K)
        "g_dw": jnp.ones((hid, 1), jnp.float32),
        "b_dw": jnp.zeros((hid, 1), jnp.float32),
        "w_pw": 0.1 * jax.random.normal(k3, (C_out, hid), jnp.float32),   # (Cout,hid,1,1)
        "g_pw": jnp.ones((C_out, 1), jnp.float32),
        "b_pw": jnp.zeros((C_out, 1), jnp.float32),
    }


def _reference(x_nchw, params, *, kernel_size, padding, stride, expand_ratio):
    """Pure-JAX NCHW reference mirroring the PyTorch module (batch-stat BN)."""
    def bn(y, gamma, beta):
        mean = jnp.mean(y, axis=(0, 2, 3), keepdims=True)
        var = jnp.mean((y - mean) ** 2, axis=(0, 2, 3), keepdims=True)
        y = (y - mean) * jax.lax.rsqrt(var + EPS)
        return y * gamma.reshape(1, -1, 1, 1) + beta.reshape(1, -1, 1, 1)

    dn = ("NCHW", "OIHW", "NCHW")
    prec = jax.lax.Precision.HIGHEST
    Cin = x_nchw.shape[1]
    hid = round(Cin * expand_ratio)
    K = kernel_size
    inputs = x_nchw
    x = x_nchw
    if expand_ratio != 1:
        w = params["w_exp"][:, :, None, None]                        # (hid, Cin, 1, 1)
        x = jax.lax.conv_general_dilated(x, w, (1, 1), "VALID",
                                         dimension_numbers=dn, precision=prec)
        x = jnp.clip(bn(x, params["g_exp"], params["b_exp"]), 0.0, 6.0)
    wdw = params["w_dw"].reshape(hid, 1, K, K)
    x = jax.lax.conv_general_dilated(
        x, wdw, (stride, stride), [(padding, padding), (padding, padding)],
        dimension_numbers=dn, feature_group_count=hid, precision=prec)
    x = jnp.clip(bn(x, params["g_dw"], params["b_dw"]), 0.0, 6.0)
    wpw = params["w_pw"][:, :, None, None]                           # (Cout, hid, 1, 1)
    x = jax.lax.conv_general_dilated(x, wpw, (1, 1), "VALID",
                                     dimension_numbers=dn, precision=prec)
    x = bn(x, params["g_pw"], params["b_pw"])
    if stride == 1 and inputs.shape[1] == x.shape[1]:
        x = inputs + x
    return x


if __name__ == "__main__":
    # InvertedResidual(C_in=4, C_out=4, kernel_size=3, padding=1, stride=1,
    #                  expand_ratio=6, affine=True, track_running_stats=False)
    C_in, C_out, K, pad, stride, expand_ratio = 4, 4, 3, 1, 1, 6
    N, H, W = 2, 16, 16

    key = jax.random.PRNGKey(0)
    kx, kp = jax.random.split(key)
    x = jax.random.normal(kx, (N, C_in, H, W), jnp.float32)
    params = make_params(kp, C_in, C_out, K, expand_ratio)

    ref = _reference(x, params, kernel_size=K, padding=pad, stride=stride,
                     expand_ratio=expand_ratio)

    # f32 matmul operands: tight check against the pure-JAX reference.
    out_f32 = inverted_residual(x, params, kernel_size=K, padding=pad,
                                stride=stride, expand_ratio=expand_ratio,
                                matmul_dtype=jnp.float32)
    out_f32 = jax.block_until_ready(out_f32)
    assert out_f32.shape == ref.shape == (N, C_out, H, W)
    assert jnp.allclose(out_f32, ref, rtol=5e-3, atol=5e-3), (
        float(jnp.max(jnp.abs(out_f32 - ref))))

    # bf16 MXU operands (production default on v6e/v7x): only the pointwise matmul
    # inputs are bf16; depthwise MACs and all BN statistics stay f32.
    out_bf16 = inverted_residual(x, params, kernel_size=K, padding=pad,
                                 stride=stride, expand_ratio=expand_ratio,
                                 matmul_dtype=jnp.bfloat16)
    out_bf16 = jax.block_until_ready(out_bf16)
    assert jnp.allclose(out_bf16, ref, rtol=5e-2, atol=5e-2), (
        float(jnp.max(jnp.abs(out_bf16 - ref))))

    print("KERNEL_OK")
</pallas_src>

<mosaic_0001>
module attributes {stable_mosaic.version = 11 : i64} {
  func.func @_inverted_residual_kernel(%arg0: memref<2x4x256xf32, #tpu.memory_space<vmem>>, %arg1: memref<2x512xi32, #tpu.memory_space<vmem>>, %arg2: memref<24x4xf32, #tpu.memory_space<vmem>>, %arg3: memref<24x1xf32, #tpu.memory_space<vmem>>, %arg4: memref<24x1xf32, #tpu.memory_space<vmem>>, %arg5: memref<24x9xf32, #tpu.memory_space<vmem>>, %arg6: memref<24x1xf32, #tpu.memory_space<vmem>>, %arg7: memref<24x1xf32, #tpu.memory_space<vmem>>, %arg8: memref<4x24xf32, #tpu.memory_space<vmem>>, %arg9: memref<4x1xf32, #tpu.memory_space<vmem>>, %arg10: memref<4x1xf32, #tpu.memory_space<vmem>>, %arg11: memref<2x4x256xf32, #tpu.memory_space<vmem>>, %arg12: memref<24x657xf32, #tpu.memory_space<vmem>>) attributes {dimension_semantics = [], scalar_prefetch = 0 : i64, scratch_operands = 1 : i64, tpu.core_type = #tpu.core_type<tc>} {
    %c0 = arith.constant 0 : index
    %c0_0 = arith.constant 0 : index
    %c0_1 = arith.constant 0 : index
    %0 = vector.load %arg0[%c0, %c0_0, %c0_1] : memref<2x4x256xf32, #tpu.memory_space<vmem>>, vector<1x4x256xf32>
    %1 = vector.shape_cast %0 : vector<1x4x256xf32> to vector<4x256xf32>
    %c1 = arith.constant 1 : index
    %c0_2 = arith.constant 0 : index
    %c0_3 = arith.constant 0 : index
    %2 = vector.load %arg0[%c1, %c0_2, %c0_3] : memref<2x4x256xf32, #tpu.memory_space<vmem>>, vector<1x4x256xf32>
    %3 = vector.shape_cast %2 : vector<1x4x256xf32> to vector<4x256xf32>
    %4 = tpu.concatenate %1, %3 in 1 : vector<4x256xf32>, vector<4x256xf32> -> vector<4x512xf32>
    %c0_4 = arith.constant 0 : index
    %c0_5 = arith.constant 0 : index
    %5 = vector.load %arg2[%c0_4, %c0_5] : memref<24x4xf32, #tpu.memory_space<vmem>>, vector<24x4xf32>
    %6 = vector.extract_strided_slice %5 {offsets = [0, 0], sizes = [24, 1], strides = [1, 1]} : vector<24x4xf32> to vector<24x1xf32>
    %7 = vector.extract_strided_slice %4 {offsets = [0, 0], sizes = [1, 512], strides = [1, 1]} : vector<4x512xf32> to vector<1x512xf32>
    %8 = vector.broadcast %6 : vector<24x1xf32> to vector<24x512xf32>
    %9 = vector.broadcast %7 : vector<1x512xf32> to vector<24x512xf32>
    %10 = arith.mulf %8, %9 : vector<24x512xf32>
    %11 = vector.extract_strided_slice %5 {offsets = [0, 1], sizes = [24, 1], strides = [1, 1]} : vector<24x4xf32> to vector<24x1xf32>
    %12 = vector.extract_strided_slice %4 {offsets = [1, 0], sizes = [1, 512], strides = [1, 1]} : vector<4x512xf32> to vector<1x512xf32>
    %13 = vector.broadcast %11 : vector<24x1xf32> to vector<24x512xf32>
    %14 = vector.broadcast %12 : vector<1x512xf32> to vector<24x512xf32>
    %15 = arith.mulf %13, %14 : vector<24x512xf32>
    %16 = arith.addf %10, %15 : vector<24x512xf32>
    %17 = vector.extract_strided_slice %5 {offsets = [0, 2], sizes = [24, 1], strides = [1, 1]} : vector<24x4xf32> to vector<24x1xf32>
    %18 = vector.extract_strided_slice %4 {offsets = [2, 0], sizes = [1, 512], strides = [1, 1]} : vector<4x512xf32> to vector<1x512xf32>
    %19 = vector.broadcast %17 : vector<24x1xf32> to vector<24x512xf32>
    %20 = vector.broadcast %18 : vector<1x512xf32> to vector<24x512xf32>
    %21 = arith.mulf %19, %20 : vector<24x512xf32>
    %22 = arith.addf %16, %21 : vector<24x512xf32>
    %23 = vector.extract_strided_slice %5 {offsets = [0, 3], sizes = [24, 1], strides = [1, 1]} : vector<24x4xf32> to vector<24x1xf32>
    %24 = vector.extract_strided_slice %4 {offsets = [3, 0], sizes = [1, 512], strides = [1, 1]} : vector<4x512xf32> to vector<1x512xf32>
    %25 = vector.broadcast %23 : vector<24x1xf32> to vector<24x512xf32>
    %26 = vector.broadcast %24 : vector<1x512xf32> to vector<24x512xf32>
    %27 = arith.mulf %25, %26 : vector<24x512xf32>
    %28 = arith.addf %22, %27 : vector<24x512xf32>
    %c0_6 = arith.constant 0 : index
    %c0_7 = arith.constant 0 : index
    %29 = vector.load %arg3[%c0_6, %c0_7] : memref<24x1xf32, #tpu.memory_space<vmem>>, vector<24x1xf32>
    %c0_8 = arith.constant 0 : index
    %c0_9 = arith.constant 0 : index
    %30 = vector.load %arg4[%c0_8, %c0_9] : memref<24x1xf32, #tpu.memory_space<vmem>>, vector<24x1xf32>
    %cst = arith.constant dense<0.000000e+00> : vector<24xf32>
    %31 = vector.multi_reduction <add>, %28, %cst [1] : vector<24x512xf32> to vector<24xf32>
    %32 = vector.shape_cast %31 : vector<24xf32> to vector<24x1xf32>
    %cst_10 = arith.constant 0.001953125 : f32
    %33 = vector.broadcast %cst_10 : f32 to vector<24x1xf32>
    %34 = arith.mulf %32, %33 : vector<24x1xf32>
    %35 = vector.broadcast %34 : vector<24x1xf32> to vector<24x512xf32>
    %36 = arith.subf %28, %35 : vector<24x512xf32>
    %37 = arith.mulf %36, %36 : vector<24x512xf32>
    %cst_11 = arith.constant dense<0.000000e+00> : vector<24xf32>
    %38 = vector.multi_reduction <add>, %37, %cst_11 [1] : vector<24x512xf32> to vector<24xf32>
    %39 = vector.shape_cast %38 : vector<24xf32> to vector<24x1xf32>
    %cst_12 = arith.constant 0.001953125 : f32
    %40 = vector.broadcast %cst_12 : f32 to vector<24x1xf32>
    %41 = arith.mulf %39, %40 : vector<24x1xf32>
    %cst_13 = arith.constant 9.99999974E-6 : f32
    %42 = vector.broadcast %cst_13 : f32 to vector<24x1xf32>
    %43 = arith.addf %41, %42 : vector<24x1xf32>
    %44 = math.rsqrt %43 : vector<24x1xf32>
    %45 = arith.mulf %29, %44 : vector<24x1xf32>
    %46 = vector.broadcast %45 : vector<24x1xf32> to vector<24x512xf32>
    %47 = arith.mulf %36, %46 : vector<24x512xf32>
    %48 = vector.broadcast %30 : vector<24x1xf32> to vector<24x512xf32>
    %49 = arith.addf %47, %48 : vector<24x512xf32>
    %cst_14 = arith.constant 0.000000e+00 : f32
    %cst_15 = arith.constant 6.000000e+00 : f32
    %50 = vector.broadcast %cst_14 : f32 to vector<24x512xf32>
    %51 = arith.maximumf %50, %49 : vector<24x512xf32>
    %52 = vector.broadcast %cst_15 : f32 to vector<24x512xf32>
    %53 = arith.minimumf %52, %51 : vector<24x512xf32>
    %cst_16 = arith.constant 0.000000e+00 : f32
    %54 = vector.broadcast %cst_16 : f32 to vector<24x128xf32>
    %c0_17 = arith.constant 0 : index
    %c0_18 = arith.constant 0 : index
    %55 = vector.load %arg12[%c0_17, %c0_18] : memref<24x657xf32, #tpu.memory_space<vmem>>, vector<24x128xf32>
    tpu.vector_store %arg12[%c0_17, %c0_18], %54 {strides = array<i32>} : memref<24x657xf32, #tpu.memory_space<vmem>>, vector<24x128xf32>,
    %cst_19 = arith.constant 0.000000e+00 : f32
    %56 = vector.broadcast %cst_19 : f32 to vector<24x17xf32>
    %c0_20 = arith.constant 0 : index
    %c640 = arith.constant 640 : index
    %57 = vector.load %arg12[%c0_20, %c640] : memref<24x657xf32, #tpu.memory_space<vmem>>, vector<24x17xf32>
    tpu.vector_store %arg12[%c0_20, %c640], %56 {strides = array<i32>} : memref<24x657xf32, #tpu.memory_space<vmem>>, vector<24x17xf32>,
    %c0_21 = arith.constant 0 : index
    %c128 = arith.constant 128 : index
    %58 = vector.load %arg12[%c0_21, %c128] : memref<24x657xf32, #tpu.memory_space<vmem>>, vector<24x512xf32>
    tpu.vector_store %arg12[%c0_21, %c128], %53 {strides = array<i32>} : memref<24x657xf32, #tpu.memory_space<vmem>>, vector<24x512xf32>,
    %c0_22 = arith.constant 0 : index
    %c0_23 = arith.constant 0 : index
    %59 = vector.load %arg1[%c0_22, %c0_23] : memref<2x512xi32, #tpu.memory_space<vmem>>, vector<1x512xi32>
    %c1_24 = arith.constant 1 : index
    %c0_25 = arith.constant 0 : index
    %60 = vector.load %arg1[%c1_24, %c0_25] : memref<2x512xi32, #tpu.memory_space<vmem>>, vector<1x512xi32>
    %c0_26 = arith.constant 0 : index
    %c0_27 = arith.constant 0 : index
    %61 = vector.load %arg5[%c0_26, %c0_27] : memref<24x9xf32, #tpu.memory_space<vmem>>, vector<24x9xf32>
    %cst_28 = arith.constant 0.000000e+00 : f32
    %62 = vector.broadcast %cst_28 : f32 to vector<24x512xf32>
    %c0_29 = arith.constant 0 : index
    %c111 = arith.constant 111 : index
    %63 = vector.load %arg12[%c0_29, %c111] : memref<24x657xf32, #tpu.memory_space<vmem>>, vector<24x512xf32>
    %c1_i32 = arith.constant 1 : i32
    %64 = vector.broadcast %c1_i32 : i32 to vector<1x512xi32>
    %65 = arith.cmpi sge, %59, %64 : vector<1x512xi32>
    %c1_i32_30 = arith.constant 1 : i32
    %66 = vector.broadcast %c1_i32_30 : i32 to vector<1x512xi32>
    %67 = arith.cmpi sge, %60, %66 : vector<1x512xi32>
    %68 = arith.andi %65, %67 : vector<1x512xi1>
    %cst_31 = arith.constant 0.000000e+00 : f32
    %69 = vector.shape_cast %68 : vector<1x512xi1> to vector<1x512xi1>
    %70 = vector.broadcast %69 : vector<1x512xi1> to vector<24x512xi1>
    %71 = vector.broadcast %cst_31 : f32 to vector<24x512xf32>
    %72 = arith.select %70, %63, %71 : vector<24x512xi1>, vector<24x512xf32>
    %73 = vector.extract_strided_slice %61 {offsets = [0, 0], sizes = [24, 1], strides = [1, 1]} : vector<24x9xf32> to vector<24x1xf32>
    %74 = vector.broadcast %73 : vector<24x1xf32> to vector<24x512xf32>
    %75 = arith.mulf %72, %74 : vector<24x512xf32>
    %76 = arith.addf %62, %75 : vector<24x512xf32>
    %c0_32 = arith.constant 0 : index
    %c112 = arith.constant 112 : index
    %77 = vector.load %arg12[%c0_32, %c112] : memref<24x657xf32, #tpu.memory_space<vmem>>, vector<24x512xf32>
    %c1_i32_33 = arith.constant 1 : i32
    %78 = vector.broadcast %c1_i32_33 : i32 to vector<1x512xi32>
    %79 = arith.cmpi sge, %59, %78 : vector<1x512xi32>
    %cst_34 = arith.constant 0.000000e+00 : f32
    %80 = vector.shape_cast %79 : vector<1x512xi1> to vector<1x512xi1>
    %81 = vector.broadcast %80 : vector<1x512xi1> to vector<24x512xi1>
    %82 = vector.broadcast %cst_34 : f32 to vector<24x512xf32>
    %83 = arith.select %81, %77, %82 : vector<24x512xi1>, vector<24x512xf32>
    %84 = vector.extract_strided_slice %61 {offsets = [0, 1], sizes = [24, 1], strides = [1, 1]} : vector<24x9xf32> to vector<24x1xf32>
    %85 = vector.broadcast %84 : vector<24x1xf32> to vector<24x512xf32>
    %86 = arith.mulf %83, %85 : vector<24x512xf32>
    %87 = arith.addf %76, %86 : vector<24x512xf32>
    %c0_35 = arith.constant 0 : index
    %c113 = arith.constant 113 : index
    %88 = vector.load %arg12[%c0_35, %c113] : memref<24x657xf32, #tpu.memory_space<vmem>>, vector<24x512xf32>
    %c1_i32_36 = arith.constant 1 : i32
    %89 = vector.broadcast %c1_i32_36 : i32 to vector<1x512xi32>
    %90 = arith.cmpi sge, %59, %89 : vector<1x512xi32>
    %c15_i32 = arith.constant 15 : i32
    %91 = vector.broadcast %c15_i32 : i32 to vector<1x512xi32>
    %92 = arith.cmpi slt, %60, %91 : vector<1x512xi32>
    %93 = arith.andi %90, %92 : vector<1x512xi1>
    %cst_37 = arith.constant 0.000000e+00 : f32
    %94 = vector.shape_cast %93 : vector<1x512xi1> to vector<1x512xi1>
    %95 = vector.broadcast %94 : vector<1x512xi1> to vector<24x512xi1>
    %96 = vector.broadcast %cst_37 : f32 to vector<24x512xf32>
    %97 = arith.select %95, %88, %96 : vector<24x512xi1>, vector<24x512xf32>
    %98 = vector.extract_strided_slice %61 {offsets = [0, 2], sizes = [24, 1], strides = [1, 1]} : vector<24x9xf32> to vector<24x1xf32>
    %99 = vector.broadcast %98 : vector<24x1xf32> to vector<24x512xf32>
    %100 = arith.mulf %97, %99 : vector<24x512xf32>
    %101 = arith.addf %87, %100 : vector<24x512xf32>
    %c0_38 = arith.constant 0 : index
    %c127 = arith.constant 127 : index
    %102 = vector.load %arg12[%c0_38, %c127] : memref<24x657xf32, #tpu.memory_space<vmem>>, vector<24x512xf32>
    %c1_i32_39 = arith.constant 1 : i32
    %103 = vector.broadcast %c1_i32_39 : i32 to vector<1x512xi32>
    %104 = arith.cmpi sge, %60, %103 : vector<1x512xi32>
    %cst_40 = arith.constant 0.000000e+00 : f32
    %105 = vector.shape_cast %104 : vector<1x512xi1> to vector<1x512xi1>
    %106 = vector.broadcast %105 : vector<1x512xi1> to vector<24x512xi1>
    %107 = vector.broadcast %cst_40 : f32 to vector<24x512xf32>
    %108 = arith.select %106, %102, %107 : vector<24x512xi1>, vector<24x512xf32>
    %109 = vector.extract_strided_slice %61 {offsets = [0, 3], sizes = [24, 1], strides = [1, 1]} : vector<24x9xf32> to vector<24x1xf32>
    %110 = vector.broadcast %109 : vector<24x1xf32> to vector<24x512xf32>
    %111 = arith.mulf %108, %110 : vector<24x512xf32>
    %112 = arith.addf %101, %111 : vector<24x512xf32>
    %c0_41 = arith.constant 0 : index
    %c128_42 = arith.constant 128 : index
    %113 = vector.load %arg12[%c0_41, %c128_42] : memref<24x657xf32, #tpu.memory_space<vmem>>, vector<24x512xf32>
    %114 = vector.extract_strided_slice %61 {offsets = [0, 4], sizes = [24, 1], strides = [1, 1]} : vector<24x9xf32> to vector<24x1xf32>
    %115 = vector.broadcast %114 : vector<24x1xf32> to vector<24x512xf32>
    %116 = arith.mulf %113, %115 : vector<24x512xf32>
    %117 = arith.addf %112, %116 : vector<24x512xf32>
    %c0_43 = arith.constant 0 : index
    %c129 = arith.constant 129 : index
    %118 = vector.load %arg12[%c0_43, %c129] : memref<24x657xf32, #tpu.memory_space<vmem>>, vector<24x512xf32>
    %c15_i32_44 = arith.constant 15 : i32
    %119 = vector.broadcast %c15_i32_44 : i32 to vector<1x512xi32>
    %120 = arith.cmpi slt, %60, %119 : vector<1x512xi32>
    %cst_45 = arith.constant 0.000000e+00 : f32
    %121 = vector.shape_cast %120 : vector<1x512xi1> to vector<1x512xi1>
    %122 = vector.broadcast %121 : vector<1x512xi1> to vector<24x512xi1>
    %123 = vector.broadcast %cst_45 : f32 to vector<24x512xf32>
    %124 = arith.select %122, %118, %123 : vector<24x512xi1>, vector<24x512xf32>
    %125 = vector.extract_strided_slice %61 {offsets = [0, 5], sizes = [24, 1], strides = [1, 1]} : vector<24x9xf32> to vector<24x1xf32>
    %126 = vector.broadcast %125 : vector<24x1xf32> to vector<24x512xf32>
    %127 = arith.mulf %124, %126 : vector<24x512xf32>
    %128 = arith.addf %117, %127 : vector<24x512xf32>
    %c0_46 = arith.constant 0 : index
    %c143 = arith.constant 143 : index
    %129 = vector.load %arg12[%c0_46, %c143] : memref<24x657xf32, #tpu.memory_space<vmem>>, vector<24x512xf32>
    %c15_i32_47 = arith.constant 15 : i32
    %130 = vector.broadcast %c15_i32_47 : i32 to vector<1x512xi32>
    %131 = arith.cmpi slt, %59, %130 : vector<1x512xi32>
    %c1_i32_48 = arith.constant 1 : i32
    %132 = vector.broadcast %c1_i32_48 : i32 to vector<1x512xi32>
    %133 = arith.cmpi sge, %60, %132 : vector<1x512xi32>
    %134 = arith.andi %131, %133 : vector<1x512xi1>
    %cst_49 = arith.constant 0.000000e+00 : f32
    %135 = vector.shape_cast %134 : vector<1x512xi1> to vector<1x512xi1>
    %136 = vector.broadcast %135 : vector<1x512xi1> to vector<24x512xi1>
    %137 = vector.broadcast %cst_49 : f32 to vector<24x512xf32>
    %138 = arith.select %136, %129, %137 : vector<24x512xi1>, vector<24x512xf32>
    %139 = vector.extract_strided_slice %61 {offsets = [0, 6], sizes = [24, 1], strides = [1, 1]} : vector<24x9xf32> to vector<24x1xf32>
    %140 = vector.broadcast %139 : vector<24x1xf32> to vector<24x512xf32>
    %141 = arith.mulf %138, %140 : vector<24x512xf32>
    %142 = arith.addf %128, %141 : vector<24x512xf32>
    %c0_50 = arith.constant 0 : index
    %c144 = arith.constant 144 : index
    %143 = vector.load %arg12[%c0_50, %c144] : memref<24x657xf32, #tpu.memory_space<vmem>>, vector<24x512xf32>
    %c15_i32_51 = arith.constant 15 : i32
    %144 = vector.broadcast %c15_i32_51 : i32 to vector<1x512xi32>
    %145 = arith.cmpi slt, %59, %144 : vector<1x512xi32>
    %cst_52 = arith.constant 0.000000e+00 : f32
    %146 = vector.shape_cast %145 : vector<1x512xi1> to vector<1x512xi1>
    %147 = vector.broadcast %146 : vector<1x512xi1> to vector<24x512xi1>
    %148 = vector.broadcast %cst_52 : f32 to vector<24x512xf32>
    %149 = arith.select %147, %143, %148 : vector<24x512xi1>, vector<24x512xf32>
    %150 = vector.extract_strided_slice %61 {offsets = [0, 7], sizes = [24, 1], strides = [1, 1]} : vector<24x9xf32> to vector<24x1xf32>
    %151 = vector.broadcast %150 : vector<24x1xf32> to vector<24x512xf32>
    %152 = arith.mulf %149, %151 : vector<24x512xf32>
    %153 = arith.addf %142, %152 : vector<24x512xf32>
    %c0_53 = arith.constant 0 : index
    %c145 = arith.constant 145 : index
    %154 = vector.load %arg12[%c0_53, %c145] : memref<24x657xf32, #tpu.memory_space<vmem>>, vector<24x512xf32>
    %c15_i32_54 = arith.constant 15 : i32
    %155 = vector.broadcast %c15_i32_54 : i32 to vector<1x512xi32>
    %156 = arith.cmpi slt, %59, %155 : vector<1x512xi32>
    %c15_i32_55 = arith.constant 15 : i32
    %157 = vector.broadcast %c15_i32_55 : i32 to vector<1x512xi32>
    %158 = arith.cmpi slt, %60, %157 : vector<1x512xi32>
    %159 = arith.andi %156, %158 : vector<1x512xi1>
    %cst_56 = arith.constant 0.000000e+00 : f32
    %160 = vector.shape_cast %159 : vector<1x512xi1> to vector<1x512xi1>
    %161 = vector.broadcast %160 : vector<1x512xi1> to vector<24x512xi1>
    %162 = vector.broadcast %cst_56 : f32 to vector<24x512xf32>
    %163 = arith.select %161, %154, %162 : vector<24x512xi1>, vector<24x512xf32>
    %164 = vector.extract_strided_slice %61 {offsets = [0, 8], sizes = [24, 1], strides = [1, 1]} : vector<24x9xf32> to vector<24x1xf32>
    %165 = vector.broadcast %164 : vector<24x1xf32> to vector<24x512xf32>
    %166 = arith.mulf %163, %165 : vector<24x512xf32>
    %167 = arith.addf %153, %166 : vector<24x512xf32>
    %c0_57 = arith.constant 0 : index
    %c0_58 = arith.constant 0 : index
    %168 = vector.load %arg6[%c0_57, %c0_58] : memref<24x1xf32, #tpu.memory_space<vmem>>, vector<24x1xf32>
    %c0_59 = arith.constant 0 : index
    %c0_60 = arith.constant 0 : index
    %169 = vector.load %arg7[%c0_59, %c0_60] : memref<24x1xf32, #tpu.memory_space<vmem>>, vector<24x1xf32>
    %cst_61 = arith.constant dense<0.000000e+00> : vector<24xf32>
    %170 = vector.multi_reduction <add>, %167, %cst_61 [1] : vector<24x512xf32> to vector<24xf32>
    %171 = vector.shape_cast %170 : vector<24xf32> to vector<24x1xf32>
    %cst_62 = arith.constant 0.001953125 : f32
    %172 = vector.broadcast %cst_62 : f32 to vector<24x1xf32>
    %173 = arith.mulf %171, %172 : vector<24x1xf32>
    %174 = vector.broadcast %173 : vector<24x1xf32> to vector<24x512xf32>
    %175 = arith.subf %167, %174 : vector<24x512xf32>
    %176 = arith.mulf %175, %175 : vector<24x512xf32>
    %cst_63 = arith.constant dense<0.000000e+00> : vector<24xf32>
    %177 = vector.multi_reduction <add>, %176, %cst_63 [1] : vector<24x512xf32> to vector<24xf32>
    %178 = vector.shape_cast %177 : vector<24xf32> to vector<24x1xf32>
    %cst_64 = arith.constant 0.001953125 : f32
    %179 = vector.broadcast %cst_64 : f32 to vector<24x1xf32>
    %180 = arith.mulf %178, %179 : vector<24x1xf32>
    %cst_65 = arith.constant 9.99999974E-6 : f32
    %181 = vector.broadcast %cst_65 : f32 to vector<24x1xf32>
    %182 = arith.addf %180, %181 : vector<24x1xf32>
    %183 = math.rsqrt %182 : vector<24x1xf32>
    %184 = arith.mulf %168, %183 : vector<24x1xf32>
    %185 = vector.broadcast %184 : vector<24x1xf32> to vector<24x512xf32>
    %186 = arith.mulf %175, %185 : vector<24x512xf32>
    %187 = vector.broadcast %169 : vector<24x1xf32> to vector<24x512xf32>
    %188 = arith.addf %186, %187 : vector<24x512xf32>
    %cst_66 = arith.constant 0.000000e+00 : f32
    %cst_67 = arith.constant 6.000000e+00 : f32
    %189 = vector.broadcast %cst_66 : f32 to vector<24x512xf32>
    %190 = arith.maximumf %189, %188 : vector<24x512xf32>
    %191 = vector.broadcast %cst_67 : f32 to vector<24x512xf32>
    %192 = arith.minimumf %191, %190 : vector<24x512xf32>
    %c0_68 = arith.constant 0 : index
    %c0_69 = arith.constant 0 : index
    %193 = vector.load %arg8[%c0_68, %c0_69] : memref<4x24xf32, #tpu.memory_space<vmem>>, vector<4x24xf32>
    %cst_70 = arith.constant dense<0.000000e+00> : vector<4x512xf32>
    %194 = tpu.matmul %193, %192, %cst_70 {dimension_numbers = #tpu.dot_dimension_numbers<[1], [0], [0], [1], [0, 0, 1, 1], [], []>} : vector<4x24xf32>, vector<24x512xf32>, vector<4x512xf32> -> vector<4x512xf32>
    %c0_71 = arith.constant 0 : index
    %c0_72 = arith.constant 0 : index
    %195 = vector.load %arg9[%c0_71, %c0_72] : memref<4x1xf32, #tpu.memory_space<vmem>>, vector<4x1xf32>
    %c0_73 = arith.constant 0 : index
    %c0_74 = arith.constant 0 : index
    %196 = vector.load %arg10[%c0_73, %c0_74] : memref<4x1xf32, #tpu.memory_space<vmem>>, vector<4x1xf32>
    %cst_75 = arith.constant dense<0.000000e+00> : vector<4xf32>
    %197 = vector.multi_reduction <add>, %194, %cst_75 [1] : vector<4x512xf32> to vector<4xf32>
    %198 = vector.shape_cast %197 : vector<4xf32> to vector<4x1xf32>
    %cst_76 = arith.constant 0.001953125 : f32
    %199 = vector.broadcast %cst_76 : f32 to vector<4x1xf32>
    %200 = arith.mulf %198, %199 : vector<4x1xf32>
    %201 = vector.broadcast %200 : vector<4x1xf32> to vector<4x512xf32>
    %202 = arith.subf %194, %201 : vector<4x512xf32>
    %203 = arith.mulf %202, %202 : vector<4x512xf32>
    %cst_77 = arith.constant dense<0.000000e+00> : vector<4xf32>
    %204 = vector.multi_reduction <add>, %203, %cst_77 [1] : vector<4x512xf32> to vector<4xf32>
    %205 = vector.shape_cast %204 : vector<4xf32> to vector<4x1xf32>
    %cst_78 = arith.constant 0.001953125 : f32
    %206 = vector.broadcast %cst_78 : f32 to vector<4x1xf32>
    %207 = arith.mulf %205, %206 : vector<4x1xf32>
    %cst_79 = arith.constant 9.99999974E-6 : f32
    %208 = vector.broadcast %cst_79 : f32 to vector<4x1xf32>
    %209 = arith.addf %207, %208 : vector<4x1xf32>
    %210 = math.rsqrt %209 : vector<4x1xf32>
    %211 = arith.mulf %195, %210 : vector<4x1xf32>
    %212 = vector.broadcast %211 : vector<4x1xf32> to vector<4x512xf32>
    %213 = arith.mulf %202, %212 : vector<4x512xf32>
    %214 = vector.broadcast %196 : vector<4x1xf32> to vector<4x512xf32>
    %215 = arith.addf %213, %214 : vector<4x512xf32>
    %216 = vector.extract_strided_slice %215 {offsets = [0, 0], sizes = [4, 256], strides = [1, 1]} : vector<4x512xf32> to vector<4x256xf32>
    %c0_80 = arith.constant 0 : index
    %c0_81 = arith.constant 0 : index
    %c0_82 = arith.constant 0 : index
    %217 = vector.load %arg0[%c0_80, %c0_81, %c0_82] : memref<2x4x256xf32, #tpu.memory_space<vmem>>, vector<1x4x256xf32>
    %218 = vector.shape_cast %217 : vector<1x4x256xf32> to vector<4x256xf32>
    %219 = arith.addf %216, %218 : vector<4x256xf32>
    %c0_83 = arith.constant 0 : index
    %c0_84 = arith.constant 0 : index
    %c0_85 = arith.constant 0 : index
    %220 = vector.load %arg11[%c0_83, %c0_84, %c0_85] : memref<2x4x256xf32, #tpu.memory_space<vmem>>, vector<1x4x256xf32>
    %221 = vector.shape_cast %220 : vector<1x4x256xf32> to vector<4x256xf32>
    %222 = vector.shape_cast %219 : vector<4x256xf32> to vector<1x4x256xf32>
    tpu.vector_store %arg11[%c0_83, %c0_84, %c0_85], %222 {strides = array<i32>} : memref<2x4x256xf32, #tpu.memory_space<vmem>>, vector<1x4x256xf32>,
    %223 = vector.extract_strided_slice %215 {offsets = [0, 256], sizes = [4, 256], strides = [1, 1]} : vector<4x512xf32> to vector<4x256xf32>
    %c1_86 = arith.constant 1 : index
    %c0_87 = arith.constant 0 : index
    %c0_88 = arith.constant 0 : index
    %224 = vector.load %arg0[%c1_86, %c0_87, %c0_88] : memref<2x4x256xf32, #tpu.memory_space<vmem>>, vector<1x4x256xf32>
    %225 = vector.shape_cast %224 : vector<1x4x256xf32> to vector<4x256xf32>
    %226 = arith.addf %223, %225 : vector<4x256xf32>
    %c1_89 = arith.constant 1 : index
    %c0_90 = arith.constant 0 : index
    %c0_91 = arith.constant 0 : index
    %227 = vector.load %arg11[%c1_89, %c0_90, %c0_91] : memref<2x4x256xf32, #tpu.memory_space<vmem>>, vector<1x4x256xf32>
    %228 = vector.shape_cast %227 : vector<1x4x256xf32> to vector<4x256xf32>
    %229 = vector.shape_cast %226 : vector<4x256xf32> to vector<1x4x256xf32>
    tpu.vector_store %arg11[%c1_89, %c0_90, %c0_91], %229 {strides = array<i32>} : memref<2x4x256xf32, #tpu.memory_space<vmem>>, vector<1x4x256xf32>,
    return
  }
}

</mosaic_0001>

<llo_original>
// kernel: tpu_custom_call.1
$region0: #{tpu_custom_call.1}
  #allocation0 [shape = 'u32[]', space=smem, size = 0x4, offset = 0x4, fixed_abs, tag = 'smem constant byte address 0x4 - core index']
  #allocation1 [shape = 'u32[144,128]{1,0:T(1,128)}', space=vmem, size = 0x12000, scoped, tag = 'internal scratch']
  #allocation2 [shape = 'f32[24,657]{1,0:T(8,128)}', space=vmem, size = 0x12000, scoped, tag = 'scratch operand']
  %s0 = inlined_call_operand.hbm [shape: f32[2,4,256], index: 0, kind: input, shape index: {}]
  %s1 = inlined_call_operand.hbm [shape: s32[2,512], index: 1, kind: input, shape index: {}]
  %s2 = inlined_call_operand.hbm [shape: f32[24,4], index: 2, kind: input, shape index: {}]
  %s3 = inlined_call_operand.hbm [shape: f32[24,1], index: 3, kind: input, shape index: {}]
  %s4 = inlined_call_operand.hbm [shape: f32[24,1], index: 4, kind: input, shape index: {}]
  %s5 = inlined_call_operand.hbm [shape: f32[24,9], index: 5, kind: input, shape index: {}]
  %s6 = inlined_call_operand.hbm [shape: f32[24,1], index: 6, kind: input, shape index: {}]
  %s7 = inlined_call_operand.hbm [shape: f32[24,1], index: 7, kind: input, shape index: {}]
  %s8 = inlined_call_operand.hbm [shape: f32[4,24], index: 8, kind: input, shape index: {}]
  %s9 = inlined_call_operand.hbm [shape: f32[4,1], index: 9, kind: input, shape index: {}]
  %s10 = inlined_call_operand.hbm [shape: f32[4,1], index: 10, kind: input, shape index: {}]
  %s11 = inlined_call_operand.hbm [shape: f32[2,4,256], index: 11, kind: output, shape index: {}]
  %s12 = sld [smem:[#allocation0]]
  $region98: #{tpu_custom_call.1} parent=0
    _
  %s14 = ssub.s32 1, %s12
  %s15 = scalar_select 0, %s14, %s12
  $region1: #{tpu_custom_call.1} parent=0
    #allocation3 [shape = 'u8[8192]{0}', space=vmem, size = 0x2000, scoped, tag = 'input window, operand 0, single buffered']
    #allocation4 [shape = 's32[1]{0}', space=sflag, size = 0x4, scoped, tag = 'scoped memory for tpu_custom_call.1']
    #allocation5 [shape = 's32[1]{0}', space=sflag, size = 0x4, scoped, tag = 'scoped memory for tpu_custom_call.1']
    #allocation6 [shape = 'u8[4096]{0}', space=vmem, size = 0x1000, scoped, tag = 'input window, operand 1, single buffered']
    #allocation7 [shape = 's32[1]{0}', space=sflag, size = 0x4, scoped, tag = 'scoped memory for tpu_custom_call.1']
    #allocation8 [shape = 'u8[12288]{0}', space=vmem, size = 0x3000, scoped, tag = 'input window, operand 2, single buffered']
    #allocation9 [shape = 'u8[12288]{0}', space=vmem, size = 0x3000, scoped, tag = 'input window, operand 3, single buffered']
    #allocation10 [shape = 's32[1]{0}', space=sflag, size = 0x4, scoped, tag = 'scoped memory for tpu_custom_call.1']
    #allocation11 [shape = 'u8[12288]{0}', space=vmem, size = 0x3000, scoped, tag = 'input window, operand 4, single buffered']
    #allocation12 [shape = 'u8[12288]{0}', space=vmem, size = 0x3000, scoped, tag = 'input window, operand 5, single buffered']
    #allocation13 [shape = 's32[1]{0}', space=sflag, size = 0x4, scoped, tag = 'scoped memory for tpu_custom_call.1']
    #allocation14 [shape = 'u8[12288]{0}', space=vmem, size = 0x3000, scoped, tag = 'input window, operand 6, single buffered']
    #allocation15 [shape = 'u8[12288]{0}', space=vmem, size = 0x3000, scoped, tag = 'input window, operand 7, single buffered']
    #allocation16 [shape = 's32[1]{0}', space=sflag, size = 0x4, scoped, tag = 'scoped memory for tpu_custom_call.1']
    #allocation17 [shape = 'u8[2048]{0}', space=vmem, size = 0x800, scoped, tag = 'input window, operand 8, single buffered']
    #allocation18 [shape = 'u8[2048]{0}', space=vmem, size = 0x800, scoped, tag = 'input window, operand 9, single buffered']
    #allocation19 [shape = 's32[1]{0}', space=sflag, size = 0x4, scoped, tag = 'scoped memory for tpu_custom_call.1']
    #allocation20 [shape = 'u8[2048]{0}', space=vmem, size = 0x800, scoped, tag = 'input window, operand 10, single buffered']
    #allocation21 [shape = 'u8[8192]{0}', space=vmem, size = 0x2000, scoped, tag = 'output window, operand 0, single buffered']
    %16 = vsyncpa [#allocation4], 0
    %17 = vsyncpa [#allocation7], 0
    %18 = vsyncpa [#allocation10], 0
    %19 = vsyncpa [#allocation13], 0
    %20 = vsyncpa [#allocation16], 0
    %21 = vsyncpa [#allocation19], 0
    %22 = vsyncpa [#allocation5], 0
    // Predicated region
    $region2: #{tpu_custom_call.1} parent=1 // pred_check
      _
    $region3: #{tpu_custom_call.1} parent=1 // pred_check_branch
      %24 = sbr.rel (0) target = $region5
    $region4: #{tpu_custom_call.1} parent=1 // pred_region
      %s26 = ssub.s32 256, 256
      %27 = vsyncadd [#allocation4], %s26
      %s28 = sshll.u32 [#allocation3], 4
      %s29 = int_to_ptr.vmem [resolvable:$true] %s28
      %34 = dma.hbm_to_vmem [thread:$0]  %s0, 256, %s29, [#allocation4], 128, 128, 8
    $region5: #{tpu_custom_call.1} parent=1 // pred_fallthru
      _
    // Predicated region
    $region6: #{tpu_custom_call.1} parent=1 // pred_check
      _
    $region7: #{tpu_custom_call.1} parent=1 // pred_check_branch
      %36 = sbr.rel (0) target = $region9
    $region8: #{tpu_custom_call.1} parent=1 // pred_region
      %s38 = ssub.s32 128, 128
      %39 = vsyncadd [#allocation7], %s38
      %s41 = sshll.u32 [#allocation6], 4
      %s42 = int_to_ptr.vmem [resolvable:$true] %s41
      %44 = dma.hbm_to_vmem [thread:$0]  %s1, 128, %s42, [#allocation7]
    $region9: #{tpu_custom_call.1} parent=1 // pred_fallthru
      _
    // Predicated region
    $region10: #{tpu_custom_call.1} parent=1 // pred_check
      _
    $region11: #{tpu_custom_call.1} parent=1 // pred_check_branch
      %46 = sbr.rel (0) target = $region13
    $region12: #{tpu_custom_call.1} parent=1 // pred_region
      %s48 = ssub.s32 384, 384
      %49 = vsyncadd [#allocation7], %s48
      %s50 = sshll.u32 [#allocation8], 4
      %s51 = int_to_ptr.vmem [resolvable:$true] %s50
      %56 = dma.hbm_to_vmem [thread:$0]  %s2, 384, %s51, [#allocation7], 128, 128, 8
    $region13: #{tpu_custom_call.1} parent=1 // pred_fallthru
      _
    // Predicated region
    $region14: #{tpu_custom_call.1} parent=1 // pred_check
      _
    $region15: #{tpu_custom_call.1} parent=1 // pred_check_branch
      %58 = sbr.rel (0) target = $region17
    $region16: #{tpu_custom_call.1} parent=1 // pred_region
      %s60 = ssub.s32 384, 384
      %61 = vsyncadd [#allocation10], %s60
      %s62 = sshll.u32 [#allocation9], 4
      %s63 = int_to_ptr.vmem [resolvable:$true] %s62
      %68 = dma.hbm_to_vmem [thread:$0]  %s3, 384, %s63, [#allocation10], 128, 128, 8
    $region17: #{tpu_custom_call.1} parent=1 // pred_fallthru
      _
    // Predicated region
    $region18: #{tpu_custom_call.1} parent=1 // pred_check
      _
    $region19: #{tpu_custom_call.1} parent=1 // pred_check_branch
      %70 = sbr.rel (0) target = $region21
    $region20: #{tpu_custom_call.1} parent=1 // pred_region
      %s72 = ssub.s32 384, 384
      %73 = vsyncadd [#allocation10], %s72
      %s74 = sshll.u32 [#allocation11], 4
      %s75 = int_to_ptr.vmem [resolvable:$true] %s74
      %80 = dma.hbm_to_vmem [thread:$0]  %s4, 384, %s75, [#allocation10], 128, 128, 8
    $region21: #{tpu_custom_call.1} parent=1 // pred_fallthru
      _
    // Predicated region
    $region22: #{tpu_custom_call.1} parent=1 // pred_check
      _
    $region23: #{tpu_custom_call.1} parent=1 // pred_check_branch
      %82 = sbr.rel (0) target = $region25
    $region24: #{tpu_custom_call.1} parent=1 // pred_region
      %s84 = ssub.s32 384, 384
      %85 = vsyncadd [#allocation13], %s84
      %s86 = sshll.u32 [#allocation12], 4
      %s87 = int_to_ptr.vmem [resolvable:$true] %s86
      %92 = dma.hbm_to_vmem [thread:$0]  %s5, 384, %s87, [#allocation13], 128, 128, 8
    $region25: #{tpu_custom_call.1} parent=1 // pred_fallthru
      _
    // Predicated region
    $region26: #{tpu_custom_call.1} parent=1 // pred_check
      _
    $region27: #{tpu_custom_call.1} parent=1 // pred_check_branch
      %94 = sbr.rel (0) target = $region29
    $region28: #{tpu_custom_call.1} parent=1 // pred_region
      %s96 = ssub.s32 384, 384
      %97 = vsyncadd [#allocation13], %s96
      %s98 = sshll.u32 [#allocation14], 4
      %s99 = int_to_ptr.vmem [resolvable:$true] %s98
      %104 = dma.hbm_to_vmem [thread:$0]  %s6, 384, %s99, [#allocation13], 128, 128, 8
    $region29: #{tpu_custom_call.1} parent=1 // pred_fallthru
      _
    // Predicated region
    $region30: #{tpu_custom_call.1} parent=1 // pred_check
      _
    $region31: #{tpu_custom_call.1} parent=1 // pred_check_branch
      %106 = sbr.rel (0) target = $region33
    $region32: #{tpu_custom_call.1} parent=1 // pred_region
      %s108 = ssub.s32 384, 384
      %109 = vsyncadd [#allocation16], %s108
      %s110 = sshll.u32 [#allocation15], 4
      %s111 = int_to_ptr.vmem [resolvable:$true] %s110
      %116 = dma.hbm_to_vmem [thread:$0]  %s7, 384, %s111, [#allocation16], 128, 128, 8
    $region33: #{tpu_custom_call.1} parent=1 // pred_fallthru
      _
    // Predicated region
    $region34: #{tpu_custom_call.1} parent=1 // pred_check
      _
    $region35: #{tpu_custom_call.1} parent=1 // pred_check_branch
      %118 = sbr.rel (0) target = $region37
    $region36: #{tpu_custom_call.1} parent=1 // pred_region
      %s120 = ssub.s32 64, 64
      %121 = vsyncadd [#allocation16], %s120
      %s123 = sshll.u32 [#allocation17], 4
      %s124 = int_to_ptr.vmem [resolvable:$true] %s123
      %126 = dma.hbm_to_vmem [thread:$0]  %s8, 64, %s124, [#allocation16]
    $region37: #{tpu_custom_call.1} parent=1 // pred_fallthru
      _
    // Predicated region
    $region38: #{tpu_custom_call.1} parent=1 // pred_check
      _
    $region39: #{tpu_custom_call.1} parent=1 // pred_check_branch
      %128 = sbr.rel (0) target = $region41
    $region40: #{tpu_custom_call.1} parent=1 // pred_region
      %s130 = ssub.s32 64, 64
      %131 = vsyncadd [#allocation19], %s130
      %s133 = sshll.u32 [#allocation18], 4
      %s134 = int_to_ptr.vmem [resolvable:$true] %s133
      %136 = dma.hbm_to_vmem [thread:$0]  %s9, 64, %s134, [#allocation19]
    $region41: #{tpu_custom_call.1} parent=1 // pred_fallthru
      _
    // Predicated region
    $region42: #{tpu_custom_call.1} parent=1 // pred_check
      _
    $region43: #{tpu_custom_call.1} parent=1 // pred_check_branch
      %138 = sbr.rel (0) target = $region45
    $region44: #{tpu_custom_call.1} parent=1 // pred_region
      %s140 = ssub.s32 64, 64
      %141 = vsyncadd [#allocation19], %s140
      %s143 = sshll.u32 [#allocation20], 4
      %s144 = int_to_ptr.vmem [resolvable:$true] %s143
      %146 = dma.hbm_to_vmem [thread:$0]  %s10, 64, %s144, [#allocation19]
    $region45: #{tpu_custom_call.1} parent=1 // pred_fallthru
      _
    // Predicated region
    $region46: #{tpu_custom_call.1} parent=1 // pred_check
      _
    $region47: #{tpu_custom_call.1} parent=1 // pred_check_branch
      %148 = sbr.rel (0) target = $region49
    $region48: #{tpu_custom_call.1} parent=1 // pred_region
      %149 = dma.done [#allocation4], 256
    $region49: #{tpu_custom_call.1} parent=1 // pred_fallthru
      _
    // Predicated region
    $region50: #{tpu_custom_call.1} parent=1 // pred_check
      _
    $region51: #{tpu_custom_call.1} parent=1 // pred_check_branch
      %151 = sbr.rel (0) target = $region53
    $region52: #{tpu_custom_call.1} parent=1 // pred_region
      %152 = dma.done [#allocation7], 128
    $region53: #{tpu_custom_call.1} parent=1 // pred_fallthru
      _
    // Predicated region
    $region54: #{tpu_custom_call.1} parent=1 // pred_check
      _
    $region55: #{tpu_custom_call.1} parent=1 // pred_check_branch
      %154 = sbr.rel (0) target = $region57
    $region56: #{tpu_custom_call.1} parent=1 // pred_region
      %155 = dma.done [#allocation7], 384
    $region57: #{tpu_custom_call.1} parent=1 // pred_fallthru
      _
    // Predicated region
    $region58: #{tpu_custom_call.1} parent=1 // pred_check
      _
    $region59: #{tpu_custom_call.1} parent=1 // pred_check_branch
      %157 = sbr.rel (0) target = $region61
    $region60: #{tpu_custom_call.1} parent=1 // pred_region
      %158 = dma.done [#allocation10], 384
    $region61: #{tpu_custom_call.1} parent=1 // pred_fallthru
      _
    // Predicated region
    $region62: #{tpu_custom_call.1} parent=1 // pred_check
      _
    $region63: #{tpu_custom_call.1} parent=1 // pred_check_branch
      %160 = sbr.rel (0) target = $region65
    $region64: #{tpu_custom_call.1} parent=1 // pred_region
      %161 = dma.done [#allocation10], 384
    $region65: #{tpu_custom_call.1} parent=1 // pred_fallthru
      _
    // Predicated region
    $region66: #{tpu_custom_call.1} parent=1 // pred_check
      _
    $region67: #{tpu_custom_call.1} parent=1 // pred_check_branch
      %163 = sbr.rel (0) target = $region69
    $region68: #{tpu_custom_call.1} parent=1 // pred_region
      %164 = dma.done [#allocation13], 384
    $region69: #{tpu_custom_call.1} parent=1 // pred_fallthru
      _
    // Predicated region
    $region70: #{tpu_custom_call.1} parent=1 // pred_check
      _
    $region71: #{tpu_custom_call.1} parent=1 // pred_check_branch
      %166 = sbr.rel (0) target = $region73
    $region72: #{tpu_custom_call.1} parent=1 // pred_region
      %167 = dma.done [#allocation13], 384
    $region73: #{tpu_custom_call.1} parent=1 // pred_fallthru
      _
    // Predicated region
    $region74: #{tpu_custom_call.1} parent=1 // pred_check
      _
    $region75: #{tpu_custom_call.1} parent=1 // pred_check_branch
      %169 = sbr.rel (0) target = $region77
    $region76: #{tpu_custom_call.1} parent=1 // pred_region
      %170 = dma.done [#allocation16], 384
    $region77: #{tpu_custom_call.1} parent=1 // pred_fallthru
      _
    // Predicated region
    $region78: #{tpu_custom_call.1} parent=1 // pred_check
      _
    $region79: #{tpu_custom_call.1} parent=1 // pred_check_branch
      %172 = sbr.rel (0) target = $region81
    $region80: #{tpu_custom_call.1} parent=1 // pred_region
      %173 = dma.done [#allocation16], 64
    $region81: #{tpu_custom_call.1} parent=1 // pred_fallthru
      _
    // Predicated region
    $region82: #{tpu_custom_call.1} parent=1 // pred_check
      _
    $region83: #{tpu_custom_call.1} parent=1 // pred_check_branch
      %175 = sbr.rel (0) target = $region85
    $region84: #{tpu_custom_call.1} parent=1 // pred_region
      %176 = dma.done [#allocation19], 64
    $region85: #{tpu_custom_call.1} parent=1 // pred_fallthru
      _
    // Predicated region
    $region86: #{tpu_custom_call.1} parent=1 // pred_check
      _
    $region87: #{tpu_custom_call.1} parent=1 // pred_check_branch
      %178 = sbr.rel (0) target = $region89
    $region88: #{tpu_custom_call.1} parent=1 // pred_region
      %179 = dma.done [#allocation19], 64
    $region89: #{tpu_custom_call.1} parent=1 // pred_fallthru
      _
    %v180 = vld [vmem:[#allocation3] sm:$0xff]
    %s181 = scalar_lea.vmem [#allocation3], 8
    %v182 = vld [vmem:[%s181] sm:$0xff]
    %v184 = vcombine.high %v180, %v180
    %v187 = vcombine.high %v182, %v182
    %v189 = vld [vmem:[#allocation8] sm:$0xff]
    %v190 = vld [vmem:[#allocation8 + $0x8] sm:$0xff]
    %v191 = vld [vmem:[#allocation8 + $0x10] sm:$0xff]
    %193 = vset.pattern.permute.xlu0 0
    %194 = vperm.xlu0 %193, %v189
    %v195 = vpop.permute.xlu0 %194
    %198 = vset.pattern.permute.xlu0 0
    %199 = vperm.xlu0 %198, %v190
    %v200 = vpop.permute.xlu0 %199
    %203 = vset.pattern.permute.xlu0 0
    %204 = vperm.xlu0 %203, %v191
    %v205 = vpop.permute.xlu0 %204
    %v207 = vlaneseq
    %v208 = vshrl.u32 %v207, 7
    %v209 = vsub.s32 0, %v208
    %v210 = vrot.slane %v180, %v209
    %v211 = vlaneseq
    %v212 = vshrl.u32 %v211, 7
    %v213 = vsub.s32 0, %v212
    %v214 = vrot.slane %v184, %v213
    %v215 = vlaneseq
    %v216 = vshrl.u32 %v215, 7
    %v217 = vsub.s32 0, %v216
    %v218 = vrot.slane %v182, %v217
    %v219 = vlaneseq
    %v220 = vshrl.u32 %v219, 7
    %v221 = vsub.s32 0, %v220
    %v222 = vrot.slane %v187, %v221
    %v223 = vmul.f32 %v195, %v210
    %v224 = vmul.f32 %v195, %v214
    %v225 = vmul.f32 %v195, %v218
    %v226 = vmul.f32 %v195, %v222
    %v227 = vmul.f32 %v200, %v210
    %v228 = vmul.f32 %v200, %v214
    %v229 = vmul.f32 %v200, %v218
    %v230 = vmul.f32 %v200, %v222
    %v231 = vmul.f32 %v205, %v210
    %v232 = vmul.f32 %v205, %v214
    %v233 = vmul.f32 %v205, %v218
    %v234 = vmul.f32 %v205, %v222
    %235 = vset.pattern.permute.xlu0 1
    %236 = vperm.xlu0 %235, %v189
    %v237 = vpop.permute.xlu0 %236
    %239 = vset.pattern.permute.xlu0 1
    %240 = vperm.xlu0 %239, %v190
    %v241 = vpop.permute.xlu0 %240
    %243 = vset.pattern.permute.xlu0 1
    %244 = vperm.xlu0 %243, %v191
    %v245 = vpop.permute.xlu0 %244
    %v247 = vlaneseq
    %v248 = vshrl.u32 %v247, 7
    %v249 = vsub.s32 1, %v248
    %v250 = vrot.slane %v180, %v249
    %v251 = vlaneseq
    %v252 = vshrl.u32 %v251, 7
    %v253 = vsub.s32 1, %v252
    %v254 = vrot.slane %v184, %v253
    %v255 = vlaneseq
    %v256 = vshrl.u32 %v255, 7
    %v257 = vsub.s32 1, %v256
    %v258 = vrot.slane %v182, %v257
    %v259 = vlaneseq
    %v260 = vshrl.u32 %v259, 7
    %v261 = vsub.s32 1, %v260
    %v262 = vrot.slane %v187, %v261
    %v263 = vmul.f32 %v237, %v250
    %v264 = vmul.f32 %v237, %v254
    %v265 = vmul.f32 %v237, %v258
    %v266 = vmul.f32 %v237, %v262
    %v267 = vmul.f32 %v241, %v250
    %v268 = vmul.f32 %v241, %v254
    %v269 = vmul.f32 %v241, %v258
    %v270 = vmul.f32 %v241, %v262
    %v271 = vmul.f32 %v245, %v250
    %v272 = vmul.f32 %v245, %v254
    %v273 = vmul.f32 %v245, %v258
    %v274 = vmul.f32 %v245, %v262
    %v275 = vadd.f32 %v223, %v263
    %v276 = vadd.f32 %v224, %v264
    %v277 = vadd.f32 %v225, %v265
    %v278 = vadd.f32 %v226, %v266
    %v279 = vadd.f32 %v227, %v267
    %v280 = vadd.f32 %v228, %v268
    %v281 = vadd.f32 %v229, %v269
    %v282 = vadd.f32 %v230, %v270
    %v283 = vadd.f32 %v231, %v271
    %v284 = vadd.f32 %v232, %v272
    %v285 = vadd.f32 %v233, %v273
    %v286 = vadd.f32 %v234, %v274
    %287 = vset.pattern.permute.xlu0 2
    %288 = vperm.xlu0 %287, %v189
    %v289 = vpop.permute.xlu0 %288
    %291 = vset.pattern.permute.xlu0 2
    %292 = vperm.xlu0 %291, %v190
    %v293 = vpop.permute.xlu0 %292
    %295 = vset.pattern.permute.xlu0 2
    %296 = vperm.xlu0 %295, %v191
    %v297 = vpop.permute.xlu0 %296
    %v299 = vlaneseq
    %v300 = vshrl.u32 %v299, 7
    %v301 = vsub.s32 2, %v300
    %v302 = vrot.slane %v180, %v301
    %v303 = vlaneseq
    %v304 = vshrl.u32 %v303, 7
    %v305 = vsub.s32 2, %v304
    %v306 = vrot.slane %v184, %v305
    %v307 = vlaneseq
    %v308 = vshrl.u32 %v307, 7
    %v309 = vsub.s32 2, %v308
    %v310 = vrot.slane %v182, %v309
    %v311 = vlaneseq
    %v312 = vshrl.u32 %v311, 7
    %v313 = vsub.s32 2, %v312
    %v314 = vrot.slane %v187, %v313
    %v315 = vmul.f32 %v289, %v302
    %v316 = vmul.f32 %v289, %v306
    %v317 = vmul.f32 %v289, %v310
    %v318 = vmul.f32 %v289, %v314
    %v319 = vmul.f32 %v293, %v302
    %v320 = vmul.f32 %v293, %v306
    %v321 = vmul.f32 %v293, %v310
    %v322 = vmul.f32 %v293, %v314
    %v323 = vmul.f32 %v297, %v302
    %v324 = vmul.f32 %v297, %v306
    %v325 = vmul.f32 %v297, %v310
    %v326 = vmul.f32 %v297, %v314
    %v327 = vadd.f32 %v275, %v315
    %v328 = vadd.f32 %v276, %v316
    %v329 = vadd.f32 %v277, %v317
    %v330 = vadd.f32 %v278, %v318
    %v331 = vadd.f32 %v279, %v319
    %v332 = vadd.f32 %v280, %v320
    %v333 = vadd.f32 %v281, %v321
    %v334 = vadd.f32 %v282, %v322
    %v335 = vadd.f32 %v283, %v323
    %v336 = vadd.f32 %v284, %v324
    %v337 = vadd.f32 %v285, %v325
    %v338 = vadd.f32 %v286, %v326
    %339 = vset.pattern.permute.xlu0 3
    %340 = vperm.xlu0 %339, %v189
    %v341 = vpop.permute.xlu0 %340
    %343 = vset.pattern.permute.xlu0 3
    %344 = vperm.xlu0 %343, %v190
    %v345 = vpop.permute.xlu0 %344
    %347 = vset.pattern.permute.xlu0 3
    %348 = vperm.xlu0 %347, %v191
    %v349 = vpop.permute.xlu0 %348
    %v351 = vlaneseq
    %v352 = vshrl.u32 %v351, 7
    %v353 = vsub.s32 3, %v352
    %v354 = vrot.slane %v180, %v353
    %v355 = vlaneseq
    %v356 = vshrl.u32 %v355, 7
    %v357 = vsub.s32 3, %v356
    %v358 = vrot.slane %v184, %v357
    %v359 = vlaneseq
    %v360 = vshrl.u32 %v359, 7
    %v361 = vsub.s32 3, %v360
    %v362 = vrot.slane %v182, %v361
    %v363 = vlaneseq
    %v364 = vshrl.u32 %v363, 7
    %v365 = vsub.s32 3, %v364
    %v366 = vrot.slane %v187, %v365
    %v367 = vmul.f32 %v341, %v354
    %v368 = vmul.f32 %v341, %v358
    %v369 = vmul.f32 %v341, %v362
    %v370 = vmul.f32 %v341, %v366
    %v371 = vmul.f32 %v345, %v354
    %v372 = vmul.f32 %v345, %v358
    %v373 = vmul.f32 %v345, %v362
    %v374 = vmul.f32 %v345, %v366
    %v375 = vmul.f32 %v349, %v354
    %v376 = vmul.f32 %v349, %v358
    %v377 = vmul.f32 %v349, %v362
    %v378 = vmul.f32 %v349, %v366
    %v379 = vadd.f32 %v327, %v367
    %v380 = vadd.f32 %v328, %v368
    %v381 = vadd.f32 %v329, %v369
    %v382 = vadd.f32 %v330, %v370
    %v383 = vadd.f32 %v331, %v371
    %v384 = vadd.f32 %v332, %v372
    %v385 = vadd.f32 %v333, %v373
    %v386 = vadd.f32 %v334, %v374
    %v387 = vadd.f32 %v335, %v375
    %v388 = vadd.f32 %v336, %v376
    %v389 = vadd.f32 %v337, %v377
    %v390 = vadd.f32 %v338, %v378
    %v391 = vld [vmem:[#allocation9] sm:$0xff]
    %v392 = vld [vmem:[#allocation9 + $0x8] sm:$0xff]
    %v393 = vld [vmem:[#allocation9 + $0x10] sm:$0xff]
    %v394 = vld [vmem:[#allocation11] sm:$0xff]
    %v395 = vld [vmem:[#allocation11 + $0x8] sm:$0xff]
    %v396 = vld [vmem:[#allocation11 + $0x10] sm:$0xff]
    %v397 = vadd.f32 %v379, %v380
    %v398 = vadd.f32 %v397, %v381
    %v399 = vadd.f32 %v398, %v382
    %400 = vadd.xlane.f32.xlu0 %v399
    %v401 = vpop.xlane.xlu0 %400
    %v402 = vadd.f32 %v383, %v384
    %v403 = vadd.f32 %v402, %v385
    %v404 = vadd.f32 %v403, %v386
    %405 = vadd.xlane.f32.xlu0 %v404
    %v406 = vpop.xlane.xlu0 %405
    %v407 = vadd.f32 %v387, %v388
    %v408 = vadd.f32 %v407, %v389
    %v409 = vadd.f32 %v408, %v390
    %410 = vadd.xlane.f32.xlu0 %v409
    %v411 = vpop.xlane.xlu0 %410
    %v412 = vmul.f32 %v401, 0.001953125
    %v413 = vmul.f32 %v406, 0.001953125
    %v414 = vmul.f32 %v411, 0.001953125
    %v415 = vsub.f32 %v379, %v412
    %v416 = vsub.f32 %v380, %v412
    %v417 = vsub.f32 %v381, %v412
    %v418 = vsub.f32 %v382, %v412
    %v419 = vsub.f32 %v383, %v413
    %v420 = vsub.f32 %v384, %v413
    %v421 = vsub.f32 %v385, %v413
    %v422 = vsub.f32 %v386, %v413
    %v423 = vsub.f32 %v387, %v414
    %v424 = vsub.f32 %v388, %v414
    %v425 = vsub.f32 %v389, %v414
    %v426 = vsub.f32 %v390, %v414
    %v427 = vmul.f32 %v415, %v415
    %v428 = vmul.f32 %v416, %v416
    %v429 = vmul.f32 %v417, %v417
    %v430 = vmul.f32 %v418, %v418
    %v431 = vmul.f32 %v419, %v419
    %v432 = vmul.f32 %v420, %v420
    %v433 = vmul.f32 %v421, %v421
    %v434 = vmul.f32 %v422, %v422
    %v435 = vmul.f32 %v423, %v423
    %v436 = vmul.f32 %v424, %v424
    %v437 = vmul.f32 %v425, %v425
    %v438 = vmul.f32 %v426, %v426
    %v439 = vadd.f32 %v427, %v428
    %v440 = vadd.f32 %v439, %v429
    %v441 = vadd.f32 %v440, %v430
    %442 = vadd.xlane.f32.xlu0 %v441
    %v443 = vpop.xlane.xlu0 %442
    %v444 = vadd.f32 %v431, %v432
    %v445 = vadd.f32 %v444, %v433
    %v446 = vadd.f32 %v445, %v434
    %447 = vadd.xlane.f32.xlu0 %v446
    %v448 = vpop.xlane.xlu0 %447
    %v449 = vadd.f32 %v435, %v436
    %v450 = vadd.f32 %v449, %v437
    %v451 = vadd.f32 %v450, %v438
    %452 = vadd.xlane.f32.xlu0 %v451
    %v453 = vpop.xlane.xlu0 %452
    %v454 = vmul.f32 %v443, 0.001953125
    %v455 = vmul.f32 %v448, 0.001953125
    %v456 = vmul.f32 %v453, 0.001953125
    %v457 = vadd.f32 %v454, 1e-05
    %v458 = vadd.f32 %v455, 1e-05
    %v459 = vadd.f32 %v456, 1e-05
    %v460 = vrsqrt.pop %v457
    %v461 = vrsqrt.pop %v458
    %v462 = vrsqrt.pop %v459
    %v463 = vmul.f32 %v391, %v460
    %v464 = vmul.f32 %v392, %v461
    %v465 = vmul.f32 %v393, %v462
    %467 = vset.pattern.permute.xlu0 0
    %468 = vperm.xlu0 %467, %v463
    %v469 = vpop.permute.xlu0 %468
    %472 = vset.pattern.permute.xlu0 0
    %473 = vperm.xlu0 %472, %v464
    %v474 = vpop.permute.xlu0 %473
    %477 = vset.pattern.permute.xlu0 0
    %478 = vperm.xlu0 %477, %v465
    %v479 = vpop.permute.xlu0 %478
    %v481 = vmul.f32 %v415, %v469
    %v482 = vmul.f32 %v416, %v469
    %v483 = vmul.f32 %v417, %v469
    %v484 = vmul.f32 %v418, %v469
    %v485 = vmul.f32 %v419, %v474
    %v486 = vmul.f32 %v420, %v474
    %v487 = vmul.f32 %v421, %v474
    %v488 = vmul.f32 %v422, %v474
    %v489 = vmul.f32 %v423, %v479
    %v490 = vmul.f32 %v424, %v479
    %v491 = vmul.f32 %v425, %v479
    %v492 = vmul.f32 %v426, %v479
    %494 = vset.pattern.permute.xlu0 0
    %495 = vperm.xlu0 %494, %v394
    %v496 = vpop.permute.xlu0 %495
    %499 = vset.pattern.permute.xlu0 0
    %500 = vperm.xlu0 %499, %v395
    %v501 = vpop.permute.xlu0 %500
    %504 = vset.pattern.permute.xlu0 0
    %505 = vperm.xlu0 %504, %v396
    %v506 = vpop.permute.xlu0 %505
    %v508 = vadd.f32 %v481, %v496
    %v509 = vadd.f32 %v482, %v496
    %v510 = vadd.f32 %v483, %v496
    %v511 = vadd.f32 %v484, %v496
    %v512 = vadd.f32 %v485, %v501
    %v513 = vadd.f32 %v486, %v501
    %v514 = vadd.f32 %v487, %v501
    %v515 = vadd.f32 %v488, %v501
    %v516 = vadd.f32 %v489, %v506
    %v517 = vadd.f32 %v490, %v506
    %v518 = vadd.f32 %v491, %v506
    %v519 = vadd.f32 %v492, %v506
    %v520 = vmax.f32 %v508, 0.0
    %v521 = vmax.f32 %v509, 0.0
    %v522 = vmax.f32 %v510, 0.0
    %v523 = vmax.f32 %v511, 0.0
    %v524 = vmax.f32 %v512, 0.0
    %v525 = vmax.f32 %v513, 0.0
    %v526 = vmax.f32 %v514, 0.0
    %v527 = vmax.f32 %v515, 0.0
    %v528 = vmax.f32 %v516, 0.0
    %v529 = vmax.f32 %v517, 0.0
    %v530 = vmax.f32 %v518, 0.0
    %v531 = vmax.f32 %v519, 0.0
    %v532 = vmin.f32 %v520, 6.0
    %v533 = vmin.f32 %v521, 6.0
    %v534 = vmin.f32 %v522, 6.0
    %v535 = vmin.f32 %v523, 6.0
    %v536 = vmin.f32 %v524, 6.0
    %v537 = vmin.f32 %v525, 6.0
    %v538 = vmin.f32 %v526, 6.0
    %v539 = vmin.f32 %v527, 6.0
    %v540 = vmin.f32 %v528, 6.0
    %v541 = vmin.f32 %v529, 6.0
    %v542 = vmin.f32 %v530, 6.0
    %v543 = vmin.f32 %v531, 6.0
    %544 = vst [vmem:[#allocation2] sm:$0xff] 0.0
    %545 = vst [vmem:[#allocation2 + $0x30] sm:$0xff] 0.0
    %546 = vst [vmem:[#allocation2 + $0x60] sm:$0xff] 0.0
    %vm547 = vcmask 138240
    %548 = vst.msk [vmem:[#allocation2 + $0x28] sm:$0xff] %vm547, 0.0
    %549 = vst.msk [vmem:[#allocation2 + $0x58] sm:$0xff] %vm547, 0.0
    %550 = vst.msk [vmem:[#allocation2 + $0x88] sm:$0xff] %vm547, 0.0
    %551 = vst [vmem:[#allocation2 + $0x8] sm:$0xff] %v532
    %552 = vst [vmem:[#allocation2 + $0x10] sm:$0xff] %v533
    %553 = vst [vmem:[#allocation2 + $0x18] sm:$0xff] %v534
    %554 = vst [vmem:[#allocation2 + $0x20] sm:$0xff] %v535
    %555 = vst [vmem:[#allocation2 + $0x38] sm:$0xff] %v536
    %556 = vst [vmem:[#allocation2 + $0x40] sm:$0xff] %v537
    %557 = vst [vmem:[#allocation2 + $0x48] sm:$0xff] %v538
    %558 = vst [vmem:[#allocation2 + $0x50] sm:$0xff] %v539
    %559 = vst [vmem:[#allocation2 + $0x68] sm:$0xff] %v540
    %560 = vst [vmem:[#allocation2 + $0x70] sm:$0xff] %v541
    %561 = vst [vmem:[#allocation2 + $0x78] sm:$0xff] %v542
    %562 = vst [vmem:[#allocation2 + $0x80] sm:$0xff] %v543
    %v563 = vld [vmem:[#allocation6] ss:$2 sm:$0xf]
    %s564 = scalar_lea.vmem [#allocation6], 1
    %v565 = vld [vmem:[%s564] ss:$2 sm:$0xf]
    %v566 = vld [vmem:[#allocation12] sm:$0xff]
    %v567 = vld [vmem:[#allocation12 + $0x8] sm:$0xff]
    %v568 = vld [vmem:[#allocation12 + $0x10] sm:$0xff]
    %v569 = vld [vmem:[#allocation2] sm:$0xff]
    %v570 = vld [vmem:[#allocation2 + $0x8] sm:$0xff]
    %v571 = vld [vmem:[#allocation2 + $0x10] sm:$0xff]
    %v572 = vld [vmem:[#allocation2 + $0x18] sm:$0xff]
    %v573 = vld [vmem:[#allocation2 + $0x20] sm:$0xff]
    %v574 = vld [vmem:[#allocation2 + $0x30] sm:$0xff]
    %v575 = vld [vmem:[#allocation2 + $0x38] sm:$0xff]
    %v576 = vld [vmem:[#allocation2 + $0x40] sm:$0xff]
    %v577 = vld [vmem:[#allocation2 + $0x48] sm:$0xff]
    %v578 = vld [vmem:[#allocation2 + $0x50] sm:$0xff]
    %v579 = vld [vmem:[#allocation2 + $0x60] sm:$0xff]
    %v580 = vld [vmem:[#allocation2 + $0x68] sm:$0xff]
    %v581 = vld [vmem:[#allocation2 + $0x70] sm:$0xff]
    %v582 = vld [vmem:[#allocation2 + $0x78] sm:$0xff]
    %v583 = vld [vmem:[#allocation2 + $0x80] sm:$0xff]
    %vm584 = vcmp.ge.s32.totalorder %v563, 1
    %vm585 = vcmp.ge.s32.totalorder %v565, 1
    %vm586 = vmand %vm584, %vm585
    %v587 = vsel %vm586, 1, 0
    %v588 = vlaneseq
    %v589 = vshrl.u32 %v588, 7
    %v590 = vsub.s32 0, %v589
    %v591 = vrot.slane %v587, %v590
    %v592 = vlaneseq
    %v593 = vshrl.u32 %v592, 7
    %v594 = vsub.s32 1, %v593
    %v595 = vrot.slane %v587, %v594
    %v596 = vlaneseq
    %v597 = vshrl.u32 %v596, 7
    %v598 = vsub.s32 2, %v597
    %v599 = vrot.slane %v587, %v598
    %v600 = vlaneseq
    %v601 = vshrl.u32 %v600, 7
    %v602 = vsub.s32 3, %v601
    %v603 = vrot.slane %v587, %v602
    %vm604 = vcmp.eq.s32.totalorder %v591, 1
    %vm605 = vcmp.eq.s32.totalorder %v595, 1
    %vm606 = vcmp.eq.s32.totalorder %v599, 1
    %vm607 = vcmp.eq.s32.totalorder %v603, 1
    %623 = vrot.lane.b32.xlu0 %v569, 17
    %v624 = vpop.permute.xlu0 %623
    %625 = vrot.lane.b32.xlu0 %v570, 17
    %v626 = vpop.permute.xlu0 %625
    %627 = vrot.lane.b32.xlu0 %v571, 17
    %v628 = vpop.permute.xlu0 %627
    %629 = vrot.lane.b32.xlu0 %v572, 17
    %v630 = vpop.permute.xlu0 %629
    %631 = vrot.lane.b32.xlu0 %v573, 17
    %v632 = vpop.permute.xlu0 %631
    %633 = vrot.lane.b32.xlu0 %v574, 17
    %v634 = vpop.permute.xlu0 %633
    %635 = vrot.lane.b32.xlu0 %v575, 17
    %v636 = vpop.permute.xlu0 %635
    %637 = vrot.lane.b32.xlu0 %v576, 17
    %v638 = vpop.permute.xlu0 %637
    %639 = vrot.lane.b32.xlu0 %v577, 17
    %v640 = vpop.permute.xlu0 %639
    %641 = vrot.lane.b32.xlu0 %v578, 17
    %v642 = vpop.permute.xlu0 %641
    %643 = vrot.lane.b32.xlu0 %v579, 17
    %v644 = vpop.permute.xlu0 %643
    %645 = vrot.lane.b32.xlu0 %v580, 17
    %v646 = vpop.permute.xlu0 %645
    %647 = vrot.lane.b32.xlu0 %v581, 17
    %v648 = vpop.permute.xlu0 %647
    %649 = vrot.lane.b32.xlu0 %v582, 17
    %v650 = vpop.permute.xlu0 %649
    %651 = vrot.lane.b32.xlu0 %v583, 17
    %v652 = vpop.permute.xlu0 %651
    %v653 = vsel %vm547, %v624, %v626
    %v654 = vsel %vm547, %v626, %v628
    %v655 = vsel %vm547, %v628, %v630
    %v656 = vsel %vm547, %v630, %v632
    %v657 = vsel %vm547, %v634, %v636
    %v658 = vsel %vm547, %v636, %v638
    %v659 = vsel %vm547, %v638, %v640
    %v660 = vsel %vm547, %v640, %v642
    %v661 = vsel %vm547, %v644, %v646
    %v662 = vsel %vm547, %v646, %v648
    %v663 = vsel %vm547, %v648, %v650
    %v664 = vsel %vm547, %v650, %v652
    %v677 = vsel %vm604, %v653, 0.0
    %v678 = vsel %vm605, %v654, 0.0
    %v679 = vsel %vm606, %v655, 0.0
    %v680 = vsel %vm607, %v656, 0.0
    %v681 = vsel %vm604, %v657, 0.0
    %v682 = vsel %vm605, %v658, 0.0
    %v683 = vsel %vm606, %v659, 0.0
    %v684 = vsel %vm607, %v660, 0.0
    %v685 = vsel %vm604, %v661, 0.0
    %v686 = vsel %vm605, %v662, 0.0
    %v687 = vsel %vm606, %v663, 0.0
    %v688 = vsel %vm607, %v664, 0.0
    %690 = vset.pattern.permute.xlu0 0
    %691 = vperm.xlu0 %690, %v566
    %v692 = vpop.permute.xlu0 %691
    %695 = vset.pattern.permute.xlu0 0
    %696 = vperm.xlu0 %695, %v567
    %v697 = vpop.permute.xlu0 %696
    %700 = vset.pattern.permute.xlu0 0
    %701 = vperm.xlu0 %700, %v568
    %v702 = vpop.permute.xlu0 %701
    %v704 = vmul.f32 %v677, %v692
    %v705 = vmul.f32 %v678, %v692
    %v706 = vmul.f32 %v679, %v692
    %v707 = vmul.f32 %v680, %v692
    %v708 = vmul.f32 %v681, %v697
    %v709 = vmul.f32 %v682, %v697
    %v710 = vmul.f32 %v683, %v697
    %v711 = vmul.f32 %v684, %v697
    %v712 = vmul.f32 %v685, %v702
    %v713 = vmul.f32 %v686, %v702
    %v714 = vmul.f32 %v687, %v702
    %v715 = vmul.f32 %v688, %v702
    %v716 = vadd.f32 %v704, 0.0
    %v717 = vadd.f32 %v705, 0.0
    %v718 = vadd.f32 %v706, 0.0
    %v719 = vadd.f32 %v707, 0.0
    %v720 = vadd.f32 %v708, 0.0
    %v721 = vadd.f32 %v709, 0.0
    %v722 = vadd.f32 %v710, 0.0
    %v723 = vadd.f32 %v711, 0.0
    %v724 = vadd.f32 %v712, 0.0
    %v725 = vadd.f32 %v713, 0.0
    %v726 = vadd.f32 %v714, 0.0
    %v727 = vadd.f32 %v715, 0.0
    %v728 = vsel %vm584, 1, 0
    %v729 = vlaneseq
    %v730 = vshrl.u32 %v729, 7
    %v731 = vsub.s32 0, %v730
    %v732 = vrot.slane %v728, %v731
    %v733 = vlaneseq
    %v734 = vshrl.u32 %v733, 7
    %v735 = vsub.s32 1, %v734
    %v736 = vrot.slane %v728, %v735
    %v737 = vlaneseq
    %v738 = vshrl.u32 %v737, 7
    %v739 = vsub.s32 2, %v738
    %v740 = vrot.slane %v728, %v739
    %v741 = vlaneseq
    %v742 = vshrl.u32 %v741, 7
    %v743 = vsub.s32 3, %v742
    %v744 = vrot.slane %v728, %v743
    %vm745 = vcmp.eq.s32.totalorder %v732, 1
    %vm746 = vcmp.eq.s32.totalorder %v736, 1
    %vm747 = vcmp.eq.s32.totalorder %v740, 1
    %vm748 = vcmp.eq.s32.totalorder %v744, 1
    %749 = vrot.lane.b32.xlu0 %v569, 16
    %v750 = vpop.permute.xlu0 %749
    %751 = vrot.lane.b32.xlu0 %v570, 16
    %v752 = vpop.permute.xlu0 %751
    %753 = vrot.lane.b32.xlu0 %v571, 16
    %v754 = vpop.permute.xlu0 %753
    %755 = vrot.lane.b32.xlu0 %v572, 16
    %v756 = vpop.permute.xlu0 %755
    %757 = vrot.lane.b32.xlu0 %v573, 16
    %v758 = vpop.permute.xlu0 %757
    %759 = vrot.lane.b32.xlu0 %v574, 16
    %v760 = vpop.permute.xlu0 %759
    %761 = vrot.lane.b32.xlu0 %v575, 16
    %v762 = vpop.permute.xlu0 %761
    %763 = vrot.lane.b32.xlu0 %v576, 16
    %v764 = vpop.permute.xlu0 %763
    %765 = vrot.lane.b32.xlu0 %v577, 16
    %v766 = vpop.permute.xlu0 %765
    %767 = vrot.lane.b32.xlu0 %v578, 16
    %v768 = vpop.permute.xlu0 %767
    %769 = vrot.lane.b32.xlu0 %v579, 16
    %v770 = vpop.permute.xlu0 %769
    %771 = vrot.lane.b32.xlu0 %v580, 16
    %v772 = vpop.permute.xlu0 %771
    %773 = vrot.lane.b32.xlu0 %v581, 16
    %v774 = vpop.permute.xlu0 %773
    %775 = vrot.lane.b32.xlu0 %v582, 16
    %v776 = vpop.permute.xlu0 %775
    %777 = vrot.lane.b32.xlu0 %v583, 16
    %v778 = vpop.permute.xlu0 %777
    %vm779 = vcmask 130048
    %v780 = vsel %vm779, %v750, %v752
    %v781 = vsel %vm779, %v752, %v754
    %v782 = vsel %vm779, %v754, %v756
    %v783 = vsel %vm779, %v756, %v758
    %v784 = vsel %vm779, %v760, %v762
    %v785 = vsel %vm779, %v762, %v764
    %v786 = vsel %vm779, %v764, %v766
    %v787 = vsel %vm779, %v766, %v768
    %v788 = vsel %vm779, %v770, %v772
    %v789 = vsel %vm779, %v772, %v774
    %v790 = vsel %vm779, %v774, %v776
    %v791 = vsel %vm779, %v776, %v778
    %v804 = vsel %vm745, %v780, 0.0
    %v805 = vsel %vm746, %v781, 0.0
    %v806 = vsel %vm747, %v782, 0.0
    %v807 = vsel %vm748, %v783, 0.0
    %v808 = vsel %vm745, %v784, 0.0
    %v809 = vsel %vm746, %v785, 0.0
    %v810 = vsel %vm747, %v786, 0.0
    %v811 = vsel %vm748, %v787, 0.0
    %v812 = vsel %vm745, %v788, 0.0
    %v813 = vsel %vm746, %v789, 0.0
    %v814 = vsel %vm747, %v790, 0.0
    %v815 = vsel %vm748, %v791, 0.0
    %816 = vset.pattern.permute.xlu0 1
    %817 = vperm.xlu0 %816, %v566
    %v818 = vpop.permute.xlu0 %817
    %820 = vset.pattern.permute.xlu0 1
    %821 = vperm.xlu0 %820, %v567
    %v822 = vpop.permute.xlu0 %821
    %824 = vset.pattern.permute.xlu0 1
    %825 = vperm.xlu0 %824, %v568
    %v826 = vpop.permute.xlu0 %825
    %v828 = vmul.f32 %v804, %v818
    %v829 = vmul.f32 %v805, %v818
    %v830 = vmul.f32 %v806, %v818
    %v831 = vmul.f32 %v807, %v818
    %v832 = vmul.f32 %v808, %v822
    %v833 = vmul.f32 %v809, %v822
    %v834 = vmul.f32 %v810, %v822
    %v835 = vmul.f32 %v811, %v822
    %v836 = vmul.f32 %v812, %v826
    %v837 = vmul.f32 %v813, %v826
    %v838 = vmul.f32 %v814, %v826
    %v839 = vmul.f32 %v815, %v826
    %v840 = vadd.f32 %v716, %v828
    %v841 = vadd.f32 %v717, %v829
    %v842 = vadd.f32 %v718, %v830
    %v843 = vadd.f32 %v719, %v831
    %v844 = vadd.f32 %v720, %v832
    %v845 = vadd.f32 %v721, %v833
    %v846 = vadd.f32 %v722, %v834
    %v847 = vadd.f32 %v723, %v835
    %v848 = vadd.f32 %v724, %v836
    %v849 = vadd.f32 %v725, %v837
    %v850 = vadd.f32 %v726, %v838
    %v851 = vadd.f32 %v727, %v839
    %vm852 = vcmp.lt.s32.totalorder %v565, 15
    %vm853 = vmand %vm584, %vm852
    %v854 = vsel %vm853, 1, 0
    %v855 = vlaneseq
    %v856 = vshrl.u32 %v855, 7
    %v857 = vsub.s32 0, %v856
    %v858 = vrot.slane %v854, %v857
    %v859 = vlaneseq
    %v860 = vshrl.u32 %v859, 7
    %v861 = vsub.s32 1, %v860
    %v862 = vrot.slane %v854, %v861
    %v863 = vlaneseq
    %v864 = vshrl.u32 %v863, 7
    %v865 = vsub.s32 2, %v864
    %v866 = vrot.slane %v854, %v865
    %v867 = vlaneseq
    %v868 = vshrl.u32 %v867, 7
    %v869 = vsub.s32 3, %v868
    %v870 = vrot.slane %v854, %v869
    %vm871 = vcmp.eq.s32.totalorder %v858, 1
    %vm872 = vcmp.eq.s32.totalorder %v862, 1
    %vm873 = vcmp.eq.s32.totalorder %v866, 1
    %vm874 = vcmp.eq.s32.totalorder %v870, 1
    %875 = vrot.lane.b32.xlu0 %v569, 15
    %v876 = vpop.permute.xlu0 %875
    %877 = vrot.lane.b32.xlu0 %v570, 15
    %v878 = vpop.permute.xlu0 %877
    %879 = vrot.lane.b32.xlu0 %v571, 15
    %v880 = vpop.permute.xlu0 %879
    %881 = vrot.lane.b32.xlu0 %v572, 15
    %v882 = vpop.permute.xlu0 %881
    %883 = vrot.lane.b32.xlu0 %v573, 15
    %v884 = vpop.permute.xlu0 %883
    %885 = vrot.lane.b32.xlu0 %v574, 15
    %v886 = vpop.permute.xlu0 %885
    %887 = vrot.lane.b32.xlu0 %v575, 15
    %v888 = vpop.permute.xlu0 %887
    %889 = vrot.lane.b32.xlu0 %v576, 15
    %v890 = vpop.permute.xlu0 %889
    %891 = vrot.lane.b32.xlu0 %v577, 15
    %v892 = vpop.permute.xlu0 %891
    %893 = vrot.lane.b32.xlu0 %v578, 15
    %v894 = vpop.permute.xlu0 %893
    %895 = vrot.lane.b32.xlu0 %v579, 15
    %v896 = vpop.permute.xlu0 %895
    %897 = vrot.lane.b32.xlu0 %v580, 15
    %v898 = vpop.permute.xlu0 %897
    %899 = vrot.lane.b32.xlu0 %v581, 15
    %v900 = vpop.permute.xlu0 %899
    %901 = vrot.lane.b32.xlu0 %v582, 15
    %v902 = vpop.permute.xlu0 %901
    %903 = vrot.lane.b32.xlu0 %v583, 15
    %v904 = vpop.permute.xlu0 %903
    %vm905 = vcmask 121856
    %v906 = vsel %vm905, %v876, %v878
    %v907 = vsel %vm905, %v878, %v880
    %v908 = vsel %vm905, %v880, %v882
    %v909 = vsel %vm905, %v882, %v884
    %v910 = vsel %vm905, %v886, %v888
    %v911 = vsel %vm905, %v888, %v890
    %v912 = vsel %vm905, %v890, %v892
    %v913 = vsel %vm905, %v892, %v894
    %v914 = vsel %vm905, %v896, %v898
    %v915 = vsel %vm905, %v898, %v900
    %v916 = vsel %vm905, %v900, %v902
    %v917 = vsel %vm905, %v902, %v904
    %v930 = vsel %vm871, %v906, 0.0
    %v931 = vsel %vm872, %v907, 0.0
    %v932 = vsel %vm873, %v908, 0.0
    %v933 = vsel %vm874, %v909, 0.0
    %v934 = vsel %vm871, %v910, 0.0
    %v935 = vsel %vm872, %v911, 0.0
    %v936 = vsel %vm873, %v912, 0.0
    %v937 = vsel %vm874, %v913, 0.0
    %v938 = vsel %vm871, %v914, 0.0
    %v939 = vsel %vm872, %v915, 0.0
    %v940 = vsel %vm873, %v916, 0.0
    %v941 = vsel %vm874, %v917, 0.0
    %942 = vset.pattern.permute.xlu0 2
    %943 = vperm.xlu0 %942, %v566
    %v944 = vpop.permute.xlu0 %943
    %946 = vset.pattern.permute.xlu0 2
    %947 = vperm.xlu0 %946, %v567
    %v948 = vpop.permute.xlu0 %947
    %950 = vset.pattern.permute.xlu0 2
    %951 = vperm.xlu0 %950, %v568
    %v952 = vpop.permute.xlu0 %951
    %v954 = vmul.f32 %v930, %v944
    %v955 = vmul.f32 %v931, %v944
    %v956 = vmul.f32 %v932, %v944
    %v957 = vmul.f32 %v933, %v944
    %v958 = vmul.f32 %v934, %v948
    %v959 = vmul.f32 %v935, %v948
    %v960 = vmul.f32 %v936, %v948
    %v961 = vmul.f32 %v937, %v948
    %v962 = vmul.f32 %v938, %v952
    %v963 = vmul.f32 %v939, %v952
    %v964 = vmul.f32 %v940, %v952
    %v965 = vmul.f32 %v941, %v952
    %v966 = vadd.f32 %v840, %v954
    %v967 = vadd.f32 %v841, %v955
    %v968 = vadd.f32 %v842, %v956
    %v969 = vadd.f32 %v843, %v957
    %v970 = vadd.f32 %v844, %v958
    %v971 = vadd.f32 %v845, %v959
    %v972 = vadd.f32 %v846, %v960
    %v973 = vadd.f32 %v847, %v961
    %v974 = vadd.f32 %v848, %v962
    %v975 = vadd.f32 %v849, %v963
    %v976 = vadd.f32 %v850, %v964
    %v977 = vadd.f32 %v851, %v965
    %v978 = vsel %vm585, 1, 0
    %v979 = vlaneseq
    %v980 = vshrl.u32 %v979, 7
    %v981 = vsub.s32 0, %v980
    %v982 = vrot.slane %v978, %v981
    %v983 = vlaneseq
    %v984 = vshrl.u32 %v983, 7
    %v985 = vsub.s32 1, %v984
    %v986 = vrot.slane %v978, %v985
    %v987 = vlaneseq
    %v988 = vshrl.u32 %v987, 7
    %v989 = vsub.s32 2, %v988
    %v990 = vrot.slane %v978, %v989
    %v991 = vlaneseq
    %v992 = vshrl.u32 %v991, 7
    %v993 = vsub.s32 3, %v992
    %v994 = vrot.slane %v978, %v993
    %vm995 = vcmp.eq.s32.totalorder %v982, 1
    %vm996 = vcmp.eq.s32.totalorder %v986, 1
    %vm997 = vcmp.eq.s32.totalorder %v990, 1
    %vm998 = vcmp.eq.s32.totalorder %v994, 1
    %999 = vrot.lane.b32.xlu0 %v569, 1
    %v1000 = vpop.permute.xlu0 %999
    %1001 = vrot.lane.b32.xlu0 %v570, 1
    %v1002 = vpop.permute.xlu0 %1001
    %1003 = vrot.lane.b32.xlu0 %v571, 1
    %v1004 = vpop.permute.xlu0 %1003
    %1005 = vrot.lane.b32.xlu0 %v572, 1
    %v1006 = vpop.permute.xlu0 %1005
    %1007 = vrot.lane.b32.xlu0 %v573, 1
    %v1008 = vpop.permute.xlu0 %1007
    %1009 = vrot.lane.b32.xlu0 %v574, 1
    %v1010 = vpop.permute.xlu0 %1009
    %1011 = vrot.lane.b32.xlu0 %v575, 1
    %v1012 = vpop.permute.xlu0 %1011
    %1013 = vrot.lane.b32.xlu0 %v576, 1
    %v1014 = vpop.permute.xlu0 %1013
    %1015 = vrot.lane.b32.xlu0 %v577, 1
    %v1016 = vpop.permute.xlu0 %1015
    %1017 = vrot.lane.b32.xlu0 %v578, 1
    %v1018 = vpop.permute.xlu0 %1017
    %1019 = vrot.lane.b32.xlu0 %v579, 1
    %v1020 = vpop.permute.xlu0 %1019
    %1021 = vrot.lane.b32.xlu0 %v580, 1
    %v1022 = vpop.permute.xlu0 %1021
    %1023 = vrot.lane.b32.xlu0 %v581, 1
    %v1024 = vpop.permute.xlu0 %1023
    %1025 = vrot.lane.b32.xlu0 %v582, 1
    %v1026 = vpop.permute.xlu0 %1025
    %1027 = vrot.lane.b32.xlu0 %v583, 1
    %v1028 = vpop.permute.xlu0 %1027
    %vm1029 = vcmask 7168
    %v1030 = vsel %vm1029, %v1000, %v1002
    %v1031 = vsel %vm1029, %v1002, %v1004
    %v1032 = vsel %vm1029, %v1004, %v1006
    %v1033 = vsel %vm1029, %v1006, %v1008
    %v1034 = vsel %vm1029, %v1010, %v1012
    %v1035 = vsel %vm1029, %v1012, %v1014
    %v1036 = vsel %vm1029, %v1014, %v1016
    %v1037 = vsel %vm1029, %v1016, %v1018
    %v1038 = vsel %vm1029, %v1020, %v1022
    %v1039 = vsel %vm1029, %v1022, %v1024
    %v1040 = vsel %vm1029, %v1024, %v1026
    %v1041 = vsel %vm1029, %v1026, %v1028
    %v1054 = vsel %vm995, %v1030, 0.0
    %v1055 = vsel %vm996, %v1031, 0.0
    %v1056 = vsel %vm997, %v1032, 0.0
    %v1057 = vsel %vm998, %v1033, 0.0
    %v1058 = vsel %vm995, %v1034, 0.0
    %v1059 = vsel %vm996, %v1035, 0.0
    %v1060 = vsel %vm997, %v1036, 0.0
    %v1061 = vsel %vm998, %v1037, 0.0
    %v1062 = vsel %vm995, %v1038, 0.0
    %v1063 = vsel %vm996, %v1039, 0.0
    %v1064 = vsel %vm997, %v1040, 0.0
    %v1065 = vsel %vm998, %v1041, 0.0
    %1066 = vset.pattern.permute.xlu0 3
    %1067 = vperm.xlu0 %1066, %v566
    %v1068 = vpop.permute.xlu0 %1067
    %1070 = vset.pattern.permute.xlu0 3
    %1071 = vperm.xlu0 %1070, %v567
    %v1072 = vpop.permute.xlu0 %1071
    %1074 = vset.pattern.permute.xlu0 3
    %1075 = vperm.xlu0 %1074, %v568
    %v1076 = vpop.permute.xlu0 %1075
    %v1078 = vmul.f32 %v1054, %v1068
    %v1079 = vmul.f32 %v1055, %v1068
    %v1080 = vmul.f32 %v1056, %v1068
    %v1081 = vmul.f32 %v1057, %v1068
    %v1082 = vmul.f32 %v1058, %v1072
    %v1083 = vmul.f32 %v1059, %v1072
    %v1084 = vmul.f32 %v1060, %v1072
    %v1085 = vmul.f32 %v1061, %v1072
    %v1086 = vmul.f32 %v1062, %v1076
    %v1087 = vmul.f32 %v1063, %v1076
    %v1088 = vmul.f32 %v1064, %v1076
    %v1089 = vmul.f32 %v1065, %v1076
    %v1090 = vadd.f32 %v966, %v1078
    %v1091 = vadd.f32 %v967, %v1079
    %v1092 = vadd.f32 %v968, %v1080
    %v1093 = vadd.f32 %v969, %v1081
    %v1094 = vadd.f32 %v970, %v1082
    %v1095 = vadd.f32 %v971, %v1083
    %v1096 = vadd.f32 %v972, %v1084
    %v1097 = vadd.f32 %v973, %v1085
    %v1098 = vadd.f32 %v974, %v1086
    %v1099 = vadd.f32 %v975, %v1087
    %v1100 = vadd.f32 %v976, %v1088
    %v1101 = vadd.f32 %v977, %v1089
    %1102 = vset.pattern.permute.xlu0 4
    %1103 = vperm.xlu0 %1102, %v566
    %v1104 = vpop.permute.xlu0 %1103
    %1106 = vset.pattern.permute.xlu0 4
    %1107 = vperm.xlu0 %1106, %v567
    %v1108 = vpop.permute.xlu0 %1107
    %1110 = vset.pattern.permute.xlu0 4
    %1111 = vperm.xlu0 %1110, %v568
    %v1112 = vpop.permute.xlu0 %1111
    %v1114 = vmul.f32 %v570, %v1104
    %v1115 = vmul.f32 %v571, %v1104
    %v1116 = vmul.f32 %v572, %v1104
    %v1117 = vmul.f32 %v573, %v1104
    %v1118 = vmul.f32 %v575, %v1108
    %v1119 = vmul.f32 %v576, %v1108
    %v1120 = vmul.f32 %v577, %v1108
    %v1121 = vmul.f32 %v578, %v1108
    %v1122 = vmul.f32 %v580, %v1112
    %v1123 = vmul.f32 %v581, %v1112
    %v1124 = vmul.f32 %v582, %v1112
    %v1125 = vmul.f32 %v583, %v1112
    %v1126 = vadd.f32 %v1090, %v1114
    %v1127 = vadd.f32 %v1091, %v1115
    %v1128 = vadd.f32 %v1092, %v1116
    %v1129 = vadd.f32 %v1093, %v1117
    %v1130 = vadd.f32 %v1094, %v1118
    %v1131 = vadd.f32 %v1095, %v1119
    %v1132 = vadd.f32 %v1096, %v1120
    %v1133 = vadd.f32 %v1097, %v1121
    %v1134 = vadd.f32 %v1098, %v1122
    %v1135 = vadd.f32 %v1099, %v1123
    %v1136 = vadd.f32 %v1100, %v1124
    %v1137 = vadd.f32 %v1101, %v1125
    %v1138 = vld [vmem:[#allocation2 + $0x8] sm:$0xff]
    %v1139 = vld [vmem:[#allocation2 + $0x10] sm:$0xff]
    %v1140 = vld [vmem:[#allocation2 + $0x18] sm:$0xff]
    %v1141 = vld [vmem:[#allocation2 + $0x20] sm:$0xff]
    %v1142 = vld [vmem:[#allocation2 + $0x28] sm:$0xff]
    %v1143 = vld [vmem:[#allocation2 + $0x38] sm:$0xff]
    %v1144 = vld [vmem:[#allocation2 + $0x40] sm:$0xff]
    %v1145 = vld [vmem:[#allocation2 + $0x48] sm:$0xff]
    %v1146 = vld [vmem:[#allocation2 + $0x50] sm:$0xff]
    %v1147 = vld [vmem:[#allocation2 + $0x58] sm:$0xff]
    %v1148 = vld [vmem:[#allocation2 + $0x68] sm:$0xff]
    %v1149 = vld [vmem:[#allocation2 + $0x70] sm:$0xff]
    %v1150 = vld [vmem:[#allocation2 + $0x78] sm:$0xff]
    %v1151 = vld [vmem:[#allocation2 + $0x80] sm:$0xff]
    %v1152 = vld [vmem:[#allocation2 + $0x88] sm:$0xff]
    %v1153 = vsel %vm852, 1, 0
    %v1154 = vlaneseq
    %v1155 = vshrl.u32 %v1154, 7
    %v1156 = vsub.s32 0, %v1155
    %v1157 = vrot.slane %v1153, %v1156
    %v1158 = vlaneseq
    %v1159 = vshrl.u32 %v1158, 7
    %v1160 = vsub.s32 1, %v1159
    %v1161 = vrot.slane %v1153, %v1160
    %v1162 = vlaneseq
    %v1163 = vshrl.u32 %v1162, 7
    %v1164 = vsub.s32 2, %v1163
    %v1165 = vrot.slane %v1153, %v1164
    %v1166 = vlaneseq
    %v1167 = vshrl.u32 %v1166, 7
    %v1168 = vsub.s32 3, %v1167
    %v1169 = vrot.slane %v1153, %v1168
    %vm1170 = vcmp.eq.s32.totalorder %v1157, 1
    %vm1171 = vcmp.eq.s32.totalorder %v1161, 1
    %vm1172 = vcmp.eq.s32.totalorder %v1165, 1
    %vm1173 = vcmp.eq.s32.totalorder %v1169, 1
    %1189 = vrot.lane.b32.xlu0 %v1138, 127
    %v1190 = vpop.permute.xlu0 %1189
    %1191 = vrot.lane.b32.xlu0 %v1139, 127
    %v1192 = vpop.permute.xlu0 %1191
    %1193 = vrot.lane.b32.xlu0 %v1140, 127
    %v1194 = vpop.permute.xlu0 %1193
    %1195 = vrot.lane.b32.xlu0 %v1141, 127
    %v1196 = vpop.permute.xlu0 %1195
    %1197 = vrot.lane.b32.xlu0 %v1142, 127
    %v1198 = vpop.permute.xlu0 %1197
    %1199 = vrot.lane.b32.xlu0 %v1143, 127
    %v1200 = vpop.permute.xlu0 %1199
    %1201 = vrot.lane.b32.xlu0 %v1144, 127
    %v1202 = vpop.permute.xlu0 %1201
    %1203 = vrot.lane.b32.xlu0 %v1145, 127
    %v1204 = vpop.permute.xlu0 %1203
    %1205 = vrot.lane.b32.xlu0 %v1146, 127
    %v1206 = vpop.permute.xlu0 %1205
    %1207 = vrot.lane.b32.xlu0 %v1147, 127
    %v1208 = vpop.permute.xlu0 %1207
    %1209 = vrot.lane.b32.xlu0 %v1148, 127
    %v1210 = vpop.permute.xlu0 %1209
    %1211 = vrot.lane.b32.xlu0 %v1149, 127
    %v1212 = vpop.permute.xlu0 %1211
    %1213 = vrot.lane.b32.xlu0 %v1150, 127
    %v1214 = vpop.permute.xlu0 %1213
    %1215 = vrot.lane.b32.xlu0 %v1151, 127
    %v1216 = vpop.permute.xlu0 %1215
    %1217 = vrot.lane.b32.xlu0 %v1152, 127
    %v1218 = vpop.permute.xlu0 %1217
    %vm1219 = vcmask 1039360
    %v1220 = vsel %vm1219, %v1190, %v1192
    %v1221 = vsel %vm1219, %v1192, %v1194
    %v1222 = vsel %vm1219, %v1194, %v1196
    %v1223 = vsel %vm1219, %v1196, %v1198
    %v1224 = vsel %vm1219, %v1200, %v1202
    %v1225 = vsel %vm1219, %v1202, %v1204
    %v1226 = vsel %vm1219, %v1204, %v1206
    %v1227 = vsel %vm1219, %v1206, %v1208
    %v1228 = vsel %vm1219, %v1210, %v1212
    %v1229 = vsel %vm1219, %v1212, %v1214
    %v1230 = vsel %vm1219, %v1214, %v1216
    %v1231 = vsel %vm1219, %v1216, %v1218
    %v1244 = vsel %vm1170, %v1220, 0.0
    %v1245 = vsel %vm1171, %v1221, 0.0
    %v1246 = vsel %vm1172, %v1222, 0.0
    %v1247 = vsel %vm1173, %v1223, 0.0
    %v1248 = vsel %vm1170, %v1224, 0.0
    %v1249 = vsel %vm1171, %v1225, 0.0
    %v1250 = vsel %vm1172, %v1226, 0.0
    %v1251 = vsel %vm1173, %v1227, 0.0
    %v1252 = vsel %vm1170, %v1228, 0.0
    %v1253 = vsel %vm1171, %v1229, 0.0
    %v1254 = vsel %vm1172, %v1230, 0.0
    %v1255 = vsel %vm1173, %v1231, 0.0
    %1256 = vset.pattern.permute.xlu0 5
    %1257 = vperm.xlu0 %1256, %v566
    %v1258 = vpop.permute.xlu0 %1257
    %1260 = vset.pattern.permute.xlu0 5
    %1261 = vperm.xlu0 %1260, %v567
    %v1262 = vpop.permute.xlu0 %1261
    %1264 = vset.pattern.permute.xlu0 5
    %1265 = vperm.xlu0 %1264, %v568
    %v1266 = vpop.permute.xlu0 %1265
    %v1268 = vmul.f32 %v1244, %v1258
    %v1269 = vmul.f32 %v1245, %v1258
    %v1270 = vmul.f32 %v1246, %v1258
    %v1271 = vmul.f32 %v1247, %v1258
    %v1272 = vmul.f32 %v1248, %v1262
    %v1273 = vmul.f32 %v1249, %v1262
    %v1274 = vmul.f32 %v1250, %v1262
    %v1275 = vmul.f32 %v1251, %v1262
    %v1276 = vmul.f32 %v1252, %v1266
    %v1277 = vmul.f32 %v1253, %v1266
    %v1278 = vmul.f32 %v1254, %v1266
    %v1279 = vmul.f32 %v1255, %v1266
    %v1280 = vadd.f32 %v1126, %v1268
    %v1281 = vadd.f32 %v1127, %v1269
    %v1282 = vadd.f32 %v1128, %v1270
    %v1283 = vadd.f32 %v1129, %v1271
    %v1284 = vadd.f32 %v1130, %v1272
    %v1285 = vadd.f32 %v1131, %v1273
    %v1286 = vadd.f32 %v1132, %v1274
    %v1287 = vadd.f32 %v1133, %v1275
    %v1288 = vadd.f32 %v1134, %v1276
    %v1289 = vadd.f32 %v1135, %v1277
    %v1290 = vadd.f32 %v1136, %v1278
    %v1291 = vadd.f32 %v1137, %v1279
    %vm1292 = vcmp.lt.s32.totalorder %v563, 15
    %vm1293 = vmand %vm1292, %vm585
    %v1294 = vsel %vm1293, 1, 0
    %v1295 = vlaneseq
    %v1296 = vshrl.u32 %v1295, 7
    %v1297 = vsub.s32 0, %v1296
    %v1298 = vrot.slane %v1294, %v1297
    %v1299 = vlaneseq
    %v1300 = vshrl.u32 %v1299, 7
    %v1301 = vsub.s32 1, %v1300
    %v1302 = vrot.slane %v1294, %v1301
    %v1303 = vlaneseq
    %v1304 = vshrl.u32 %v1303, 7
    %v1305 = vsub.s32 2, %v1304
    %v1306 = vrot.slane %v1294, %v1305
    %v1307 = vlaneseq
    %v1308 = vshrl.u32 %v1307, 7
    %v1309 = vsub.s32 3, %v1308
    %v1310 = vrot.slane %v1294, %v1309
    %vm1311 = vcmp.eq.s32.totalorder %v1298, 1
    %vm1312 = vcmp.eq.s32.totalorder %v1302, 1
    %vm1313 = vcmp.eq.s32.totalorder %v1306, 1
    %vm1314 = vcmp.eq.s32.totalorder %v1310, 1
    %1315 = vrot.lane.b32.xlu0 %v1138, 113
    %v1316 = vpop.permute.xlu0 %1315
    %1317 = vrot.lane.b32.xlu0 %v1139, 113
    %v1318 = vpop.permute.xlu0 %1317
    %1319 = vrot.lane.b32.xlu0 %v1140, 113
    %v1320 = vpop.permute.xlu0 %1319
    %1321 = vrot.lane.b32.xlu0 %v1141, 113
    %v1322 = vpop.permute.xlu0 %1321
    %1323 = vrot.lane.b32.xlu0 %v1142, 113
    %v1324 = vpop.permute.xlu0 %1323
    %1325 = vrot.lane.b32.xlu0 %v1143, 113
    %v1326 = vpop.permute.xlu0 %1325
    %1327 = vrot.lane.b32.xlu0 %v1144, 113
    %v1328 = vpop.permute.xlu0 %1327
    %1329 = vrot.lane.b32.xlu0 %v1145, 113
    %v1330 = vpop.permute.xlu0 %1329
    %1331 = vrot.lane.b32.xlu0 %v1146, 113
    %v1332 = vpop.permute.xlu0 %1331
    %1333 = vrot.lane.b32.xlu0 %v1147, 113
    %v1334 = vpop.permute.xlu0 %1333
    %1335 = vrot.lane.b32.xlu0 %v1148, 113
    %v1336 = vpop.permute.xlu0 %1335
    %1337 = vrot.lane.b32.xlu0 %v1149, 113
    %v1338 = vpop.permute.xlu0 %1337
    %1339 = vrot.lane.b32.xlu0 %v1150, 113
    %v1340 = vpop.permute.xlu0 %1339
    %1341 = vrot.lane.b32.xlu0 %v1151, 113
    %v1342 = vpop.permute.xlu0 %1341
    %1343 = vrot.lane.b32.xlu0 %v1152, 113
    %v1344 = vpop.permute.xlu0 %1343
    %vm1345 = vcmask 924672
    %v1346 = vsel %vm1345, %v1316, %v1318
    %v1347 = vsel %vm1345, %v1318, %v1320
    %v1348 = vsel %vm1345, %v1320, %v1322
    %v1349 = vsel %vm1345, %v1322, %v1324
    %v1350 = vsel %vm1345, %v1326, %v1328
    %v1351 = vsel %vm1345, %v1328, %v1330
    %v1352 = vsel %vm1345, %v1330, %v1332
    %v1353 = vsel %vm1345, %v1332, %v1334
    %v1354 = vsel %vm1345, %v1336, %v1338
    %v1355 = vsel %vm1345, %v1338, %v1340
    %v1356 = vsel %vm1345, %v1340, %v1342
    %v1357 = vsel %vm1345, %v1342, %v1344
    %v1370 = vsel %vm1311, %v1346, 0.0
    %v1371 = vsel %vm1312, %v1347, 0.0
    %v1372 = vsel %vm1313, %v1348, 0.0
    %v1373 = vsel %vm1314, %v1349, 0.0
    %v1374 = vsel %vm1311, %v1350, 0.0
    %v1375 = vsel %vm1312, %v1351, 0.0
    %v1376 = vsel %vm1313, %v1352, 0.0
    %v1377 = vsel %vm1314, %v1353, 0.0
    %v1378 = vsel %vm1311, %v1354, 0.0
    %v1379 = vsel %vm1312, %v1355, 0.0
    %v1380 = vsel %vm1313, %v1356, 0.0
    %v1381 = vsel %vm1314, %v1357, 0.0
    %1382 = vset.pattern.permute.xlu0 6
    %1383 = vperm.xlu0 %1382, %v566
    %v1384 = vpop.permute.xlu0 %1383
    %1386 = vset.pattern.permute.xlu0 6
    %1387 = vperm.xlu0 %1386, %v567
    %v1388 = vpop.permute.xlu0 %1387
    %1390 = vset.pattern.permute.xlu0 6
    %1391 = vperm.xlu0 %1390, %v568
    %v1392 = vpop.permute.xlu0 %1391
    %v1394 = vmul.f32 %v1370, %v1384
    %v1395 = vmul.f32 %v1371, %v1384
    %v1396 = vmul.f32 %v1372, %v1384
    %v1397 = vmul.f32 %v1373, %v1384
    %v1398 = vmul.f32 %v1374, %v1388
    %v1399 = vmul.f32 %v1375, %v1388
    %v1400 = vmul.f32 %v1376, %v1388
    %v1401 = vmul.f32 %v1377, %v1388
    %v1402 = vmul.f32 %v1378, %v1392
    %v1403 = vmul.f32 %v1379, %v1392
    %v1404 = vmul.f32 %v1380, %v1392
    %v1405 = vmul.f32 %v1381, %v1392
    %v1406 = vadd.f32 %v1280, %v1394
    %v1407 = vadd.f32 %v1281, %v1395
    %v1408 = vadd.f32 %v1282, %v1396
    %v1409 = vadd.f32 %v1283, %v1397
    %v1410 = vadd.f32 %v1284, %v1398
    %v1411 = vadd.f32 %v1285, %v1399
    %v1412 = vadd.f32 %v1286, %v1400
    %v1413 = vadd.f32 %v1287, %v1401
    %v1414 = vadd.f32 %v1288, %v1402
    %v1415 = vadd.f32 %v1289, %v1403
    %v1416 = vadd.f32 %v1290, %v1404
    %v1417 = vadd.f32 %v1291, %v1405
    %v1418 = vsel %vm1292, 1, 0
    %v1419 = vlaneseq
    %v1420 = vshrl.u32 %v1419, 7
    %v1421 = vsub.s32 0, %v1420
    %v1422 = vrot.slane %v1418, %v1421
    %v1423 = vlaneseq
    %v1424 = vshrl.u32 %v1423, 7
    %v1425 = vsub.s32 1, %v1424
    %v1426 = vrot.slane %v1418, %v1425
    %v1427 = vlaneseq
    %v1428 = vshrl.u32 %v1427, 7
    %v1429 = vsub.s32 2, %v1428
    %v1430 = vrot.slane %v1418, %v1429
    %v1431 = vlaneseq
    %v1432 = vshrl.u32 %v1431, 7
    %v1433 = vsub.s32 3, %v1432
    %v1434 = vrot.slane %v1418, %v1433
    %vm1435 = vcmp.eq.s32.totalorder %v1422, 1
    %vm1436 = vcmp.eq.s32.totalorder %v1426, 1
    %vm1437 = vcmp.eq.s32.totalorder %v1430, 1
    %vm1438 = vcmp.eq.s32.totalorder %v1434, 1
    %1439 = vrot.lane.b32.xlu0 %v1138, 112
    %v1440 = vpop.permute.xlu0 %1439
    %1441 = vrot.lane.b32.xlu0 %v1139, 112
    %v1442 = vpop.permute.xlu0 %1441
    %1443 = vrot.lane.b32.xlu0 %v1140, 112
    %v1444 = vpop.permute.xlu0 %1443
    %1445 = vrot.lane.b32.xlu0 %v1141, 112
    %v1446 = vpop.permute.xlu0 %1445
    %1447 = vrot.lane.b32.xlu0 %v1142, 112
    %v1448 = vpop.permute.xlu0 %1447
    %1449 = vrot.lane.b32.xlu0 %v1143, 112
    %v1450 = vpop.permute.xlu0 %1449
    %1451 = vrot.lane.b32.xlu0 %v1144, 112
    %v1452 = vpop.permute.xlu0 %1451
    %1453 = vrot.lane.b32.xlu0 %v1145, 112
    %v1454 = vpop.permute.xlu0 %1453
    %1455 = vrot.lane.b32.xlu0 %v1146, 112
    %v1456 = vpop.permute.xlu0 %1455
    %1457 = vrot.lane.b32.xlu0 %v1147, 112
    %v1458 = vpop.permute.xlu0 %1457
    %1459 = vrot.lane.b32.xlu0 %v1148, 112
    %v1460 = vpop.permute.xlu0 %1459
    %1461 = vrot.lane.b32.xlu0 %v1149, 112
    %v1462 = vpop.permute.xlu0 %1461
    %1463 = vrot.lane.b32.xlu0 %v1150, 112
    %v1464 = vpop.permute.xlu0 %1463
    %1465 = vrot.lane.b32.xlu0 %v1151, 112
    %v1466 = vpop.permute.xlu0 %1465
    %1467 = vrot.lane.b32.xlu0 %v1152, 112
    %v1468 = vpop.permute.xlu0 %1467
    %vm1469 = vcmask 916480
    %v1470 = vsel %vm1469, %v1440, %v1442
    %v1471 = vsel %vm1469, %v1442, %v1444
    %v1472 = vsel %vm1469, %v1444, %v1446
    %v1473 = vsel %vm1469, %v1446, %v1448
    %v1474 = vsel %vm1469, %v1450, %v1452
    %v1475 = vsel %vm1469, %v1452, %v1454
    %v1476 = vsel %vm1469, %v1454, %v1456
    %v1477 = vsel %vm1469, %v1456, %v1458
    %v1478 = vsel %vm1469, %v1460, %v1462
    %v1479 = vsel %vm1469, %v1462, %v1464
    %v1480 = vsel %vm1469, %v1464, %v1466
    %v1481 = vsel %vm1469, %v1466, %v1468
    %v1494 = vsel %vm1435, %v1470, 0.0
    %v1495 = vsel %vm1436, %v1471, 0.0
    %v1496 = vsel %vm1437, %v1472, 0.0
    %v1497 = vsel %vm1438, %v1473, 0.0
    %v1498 = vsel %vm1435, %v1474, 0.0
    %v1499 = vsel %vm1436, %v1475, 0.0
    %v1500 = vsel %vm1437, %v1476, 0.0
    %v1501 = vsel %vm1438, %v1477, 0.0
    %v1502 = vsel %vm1435, %v1478, 0.0
    %v1503 = vsel %vm1436, %v1479, 0.0
    %v1504 = vsel %vm1437, %v1480, 0.0
    %v1505 = vsel %vm1438, %v1481, 0.0
    %1506 = vset.pattern.permute.xlu0 7
    %1507 = vperm.xlu0 %1506, %v566
    %v1508 = vpop.permute.xlu0 %1507
    %1510 = vset.pattern.permute.xlu0 7
    %1511 = vperm.xlu0 %1510, %v567
    %v1512 = vpop.permute.xlu0 %1511
    %1514 = vset.pattern.permute.xlu0 7
    %1515 = vperm.xlu0 %1514, %v568
    %v1516 = vpop.permute.xlu0 %1515
    %v1518 = vmul.f32 %v1494, %v1508
    %v1519 = vmul.f32 %v1495, %v1508
    %v1520 = vmul.f32 %v1496, %v1508
    %v1521 = vmul.f32 %v1497, %v1508
    %v1522 = vmul.f32 %v1498, %v1512
    %v1523 = vmul.f32 %v1499, %v1512
    %v1524 = vmul.f32 %v1500, %v1512
    %v1525 = vmul.f32 %v1501, %v1512
    %v1526 = vmul.f32 %v1502, %v1516
    %v1527 = vmul.f32 %v1503, %v1516
    %v1528 = vmul.f32 %v1504, %v1516
    %v1529 = vmul.f32 %v1505, %v1516
    %v1530 = vadd.f32 %v1406, %v1518
    %v1531 = vadd.f32 %v1407, %v1519
    %v1532 = vadd.f32 %v1408, %v1520
    %v1533 = vadd.f32 %v1409, %v1521
    %v1534 = vadd.f32 %v1410, %v1522
    %v1535 = vadd.f32 %v1411, %v1523
    %v1536 = vadd.f32 %v1412, %v1524
    %v1537 = vadd.f32 %v1413, %v1525
    %v1538 = vadd.f32 %v1414, %v1526
    %v1539 = vadd.f32 %v1415, %v1527
    %v1540 = vadd.f32 %v1416, %v1528
    %v1541 = vadd.f32 %v1417, %v1529
    %vm1542 = vmand %vm1292, %vm852
    %v1543 = vsel %vm1542, 1, 0
    %v1544 = vlaneseq
    %v1545 = vshrl.u32 %v1544, 7
    %v1546 = vsub.s32 0, %v1545
    %v1547 = vrot.slane %v1543, %v1546
    %v1548 = vlaneseq
    %v1549 = vshrl.u32 %v1548, 7
    %v1550 = vsub.s32 1, %v1549
    %v1551 = vrot.slane %v1543, %v1550
    %v1552 = vlaneseq
    %v1553 = vshrl.u32 %v1552, 7
    %v1554 = vsub.s32 2, %v1553
    %v1555 = vrot.slane %v1543, %v1554
    %v1556 = vlaneseq
    %v1557 = vshrl.u32 %v1556, 7
    %v1558 = vsub.s32 3, %v1557
    %v1559 = vrot.slane %v1543, %v1558
    %vm1560 = vcmp.eq.s32.totalorder %v1547, 1
    %vm1561 = vcmp.eq.s32.totalorder %v1551, 1
    %vm1562 = vcmp.eq.s32.totalorder %v1555, 1
    %vm1563 = vcmp.eq.s32.totalorder %v1559, 1
    %1564 = vrot.lane.b32.xlu0 %v1138, 111
    %v1565 = vpop.permute.xlu0 %1564
    %1566 = vrot.lane.b32.xlu0 %v1139, 111
    %v1567 = vpop.permute.xlu0 %1566
    %1568 = vrot.lane.b32.xlu0 %v1140, 111
    %v1569 = vpop.permute.xlu0 %1568
    %1570 = vrot.lane.b32.xlu0 %v1141, 111
    %v1571 = vpop.permute.xlu0 %1570
    %1572 = vrot.lane.b32.xlu0 %v1142, 111
    %v1573 = vpop.permute.xlu0 %1572
    %1574 = vrot.lane.b32.xlu0 %v1143, 111
    %v1575 = vpop.permute.xlu0 %1574
    %1576 = vrot.lane.b32.xlu0 %v1144, 111
    %v1577 = vpop.permute.xlu0 %1576
    %1578 = vrot.lane.b32.xlu0 %v1145, 111
    %v1579 = vpop.permute.xlu0 %1578
    %1580 = vrot.lane.b32.xlu0 %v1146, 111
    %v1581 = vpop.permute.xlu0 %1580
    %1582 = vrot.lane.b32.xlu0 %v1147, 111
    %v1583 = vpop.permute.xlu0 %1582
    %1584 = vrot.lane.b32.xlu0 %v1148, 111
    %v1585 = vpop.permute.xlu0 %1584
    %1586 = vrot.lane.b32.xlu0 %v1149, 111
    %v1587 = vpop.permute.xlu0 %1586
    %1588 = vrot.lane.b32.xlu0 %v1150, 111
    %v1589 = vpop.permute.xlu0 %1588
    %1590 = vrot.lane.b32.xlu0 %v1151, 111
    %v1591 = vpop.permute.xlu0 %1590
    %1592 = vrot.lane.b32.xlu0 %v1152, 111
    %v1593 = vpop.permute.xlu0 %1592
    %vm1594 = vcmask 908288
    %v1595 = vsel %vm1594, %v1565, %v1567
    %v1596 = vsel %vm1594, %v1567, %v1569
    %v1597 = vsel %vm1594, %v1569, %v1571
    %v1598 = vsel %vm1594, %v1571, %v1573
    %v1599 = vsel %vm1594, %v1575, %v1577
    %v1600 = vsel %vm1594, %v1577, %v1579
    %v1601 = vsel %vm1594, %v1579, %v1581
    %v1602 = vsel %vm1594, %v1581, %v1583
    %v1603 = vsel %vm1594, %v1585, %v1587
    %v1604 = vsel %vm1594, %v1587, %v1589
    %v1605 = vsel %vm1594, %v1589, %v1591
    %v1606 = vsel %vm1594, %v1591, %v1593
    %v1619 = vsel %vm1560, %v1595, 0.0
    %v1620 = vsel %vm1561, %v1596, 0.0
    %v1621 = vsel %vm1562, %v1597, 0.0
    %v1622 = vsel %vm1563, %v1598, 0.0
    %v1623 = vsel %vm1560, %v1599, 0.0
    %v1624 = vsel %vm1561, %v1600, 0.0
    %v1625 = vsel %vm1562, %v1601, 0.0
    %v1626 = vsel %vm1563, %v1602, 0.0
    %v1627 = vsel %vm1560, %v1603, 0.0
    %v1628 = vsel %vm1561, %v1604, 0.0
    %v1629 = vsel %vm1562, %v1605, 0.0
    %v1630 = vsel %vm1563, %v1606, 0.0
    %1631 = vset.pattern.permute.xlu0 8
    %1632 = vperm.xlu0 %1631, %v566
    %v1633 = vpop.permute.xlu0 %1632
    %1635 = vset.pattern.permute.xlu0 8
    %1636 = vperm.xlu0 %1635, %v567
    %v1637 = vpop.permute.xlu0 %1636
    %1639 = vset.pattern.permute.xlu0 8
    %1640 = vperm.xlu0 %1639, %v568
    %v1641 = vpop.permute.xlu0 %1640
    %v1643 = vmul.f32 %v1619, %v1633
    %v1644 = vmul.f32 %v1620, %v1633
    %v1645 = vmul.f32 %v1621, %v1633
    %v1646 = vmul.f32 %v1622, %v1633
    %v1647 = vmul.f32 %v1623, %v1637
    %v1648 = vmul.f32 %v1624, %v1637
    %v1649 = vmul.f32 %v1625, %v1637
    %v1650 = vmul.f32 %v1626, %v1637
    %v1651 = vmul.f32 %v1627, %v1641
    %v1652 = vmul.f32 %v1628, %v1641
    %v1653 = vmul.f32 %v1629, %v1641
    %v1654 = vmul.f32 %v1630, %v1641
    %v1655 = vadd.f32 %v1530, %v1643
    %v1656 = vadd.f32 %v1531, %v1644
    %v1657 = vadd.f32 %v1532, %v1645
    %v1658 = vadd.f32 %v1533, %v1646
    %v1659 = vadd.f32 %v1534, %v1647
    %v1660 = vadd.f32 %v1535, %v1648
    %v1661 = vadd.f32 %v1536, %v1649
    %v1662 = vadd.f32 %v1537, %v1650
    %v1663 = vadd.f32 %v1538, %v1651
    %v1664 = vadd.f32 %v1539, %v1652
    %v1665 = vadd.f32 %v1540, %v1653
    %v1666 = vadd.f32 %v1541, %v1654
    %v1667 = vld [vmem:[#allocation14] sm:$0xff]
    %v1668 = vld [vmem:[#allocation14 + $0x8] sm:$0xff]
    %v1669 = vld [vmem:[#allocation14 + $0x10] sm:$0xff]
    %v1670 = vld [vmem:[#allocation15] sm:$0xff]
    %v1671 = vld [vmem:[#allocation15 + $0x8] sm:$0xff]
    %v1672 = vld [vmem:[#allocation15 + $0x10] sm:$0xff]
    %v1673 = vadd.f32 %v1655, %v1656
    %v1674 = vadd.f32 %v1673, %v1657
    %v1675 = vadd.f32 %v1674, %v1658
    %1676 = vadd.xlane.f32.xlu0 %v1675
    %v1677 = vpop.xlane.xlu0 %1676
    %v1678 = vadd.f32 %v1659, %v1660
    %v1679 = vadd.f32 %v1678, %v1661
    %v1680 = vadd.f32 %v1679, %v1662
    %1681 = vadd.xlane.f32.xlu0 %v1680
    %v1682 = vpop.xlane.xlu0 %1681
    %v1683 = vadd.f32 %v1663, %v1664
    %v1684 = vadd.f32 %v1683, %v1665
    %v1685 = vadd.f32 %v1684, %v1666
    %1686 = vadd.xlane.f32.xlu0 %v1685
    %v1687 = vpop.xlane.xlu0 %1686
    %v1688 = vmul.f32 %v1677, 0.001953125
    %v1689 = vmul.f32 %v1682, 0.001953125
    %v1690 = vmul.f32 %v1687, 0.001953125
    %v1691 = vsub.f32 %v1655, %v1688
    %v1692 = vsub.f32 %v1656, %v1688
    %v1693 = vsub.f32 %v1657, %v1688
    %v1694 = vsub.f32 %v1658, %v1688
    %v1695 = vsub.f32 %v1659, %v1689
    %v1696 = vsub.f32 %v1660, %v1689
    %v1697 = vsub.f32 %v1661, %v1689
    %v1698 = vsub.f32 %v1662, %v1689
    %v1699 = vsub.f32 %v1663, %v1690
    %v1700 = vsub.f32 %v1664, %v1690
    %v1701 = vsub.f32 %v1665, %v1690
    %v1702 = vsub.f32 %v1666, %v1690
    %v1703 = vmul.f32 %v1691, %v1691
    %v1704 = vmul.f32 %v1692, %v1692
    %v1705 = vmul.f32 %v1693, %v1693
    %v1706 = vmul.f32 %v1694, %v1694
    %v1707 = vmul.f32 %v1695, %v1695
    %v1708 = vmul.f32 %v1696, %v1696
    %v1709 = vmul.f32 %v1697, %v1697
    %v1710 = vmul.f32 %v1698, %v1698
    %v1711 = vmul.f32 %v1699, %v1699
    %v1712 = vmul.f32 %v1700, %v1700
    %v1713 = vmul.f32 %v1701, %v1701
    %v1714 = vmul.f32 %v1702, %v1702
    %v1715 = vadd.f32 %v1703, %v1704
    %v1716 = vadd.f32 %v1715, %v1705
    %v1717 = vadd.f32 %v1716, %v1706
    %1718 = vadd.xlane.f32.xlu0 %v1717
    %v1719 = vpop.xlane.xlu0 %1718
    %v1720 = vadd.f32 %v1707, %v1708
    %v1721 = vadd.f32 %v1720, %v1709
    %v1722 = vadd.f32 %v1721, %v1710
    %1723 = vadd.xlane.f32.xlu0 %v1722
    %v1724 = vpop.xlane.xlu0 %1723
    %v1725 = vadd.f32 %v1711, %v1712
    %v1726 = vadd.f32 %v1725, %v1713
    %v1727 = vadd.f32 %v1726, %v1714
    %1728 = vadd.xlane.f32.xlu0 %v1727
    %v1729 = vpop.xlane.xlu0 %1728
    %v1730 = vmul.f32 %v1719, 0.001953125
    %v1731 = vmul.f32 %v1724, 0.001953125
    %v1732 = vmul.f32 %v1729, 0.001953125
    %v1733 = vadd.f32 %v1730, 1e-05
    %v1734 = vadd.f32 %v1731, 1e-05
    %v1735 = vadd.f32 %v1732, 1e-05
    %v1736 = vrsqrt.pop %v1733
    %v1737 = vrsqrt.pop %v1734
    %v1738 = vrsqrt.pop %v1735
    %v1739 = vmul.f32 %v1667, %v1736
    %v1740 = vmul.f32 %v1668, %v1737
    %v1741 = vmul.f32 %v1669, %v1738
    %1743 = vset.pattern.permute.xlu0 0
    %1744 = vperm.xlu0 %1743, %v1739
    %v1745 = vpop.permute.xlu0 %1744
    %1748 = vset.pattern.permute.xlu0 0
    %1749 = vperm.xlu0 %1748, %v1740
    %v1750 = vpop.permute.xlu0 %1749
    %1753 = vset.pattern.permute.xlu0 0
    %1754 = vperm.xlu0 %1753, %v1741
    %v1755 = vpop.permute.xlu0 %1754
    %v1757 = vmul.f32 %v1691, %v1745
    %v1758 = vmul.f32 %v1692, %v1745
    %v1759 = vmul.f32 %v1693, %v1745
    %v1760 = vmul.f32 %v1694, %v1745
    %v1761 = vmul.f32 %v1695, %v1750
    %v1762 = vmul.f32 %v1696, %v1750
    %v1763 = vmul.f32 %v1697, %v1750
    %v1764 = vmul.f32 %v1698, %v1750
    %v1765 = vmul.f32 %v1699, %v1755
    %v1766 = vmul.f32 %v1700, %v1755
    %v1767 = vmul.f32 %v1701, %v1755
    %v1768 = vmul.f32 %v1702, %v1755
    %1770 = vset.pattern.permute.xlu0 0
    %1771 = vperm.xlu0 %1770, %v1670
    %v1772 = vpop.permute.xlu0 %1771
    %1775 = vset.pattern.permute.xlu0 0
    %1776 = vperm.xlu0 %1775, %v1671
    %v1777 = vpop.permute.xlu0 %1776
    %1780 = vset.pattern.permute.xlu0 0
    %1781 = vperm.xlu0 %1780, %v1672
    %v1782 = vpop.permute.xlu0 %1781
    %v1784 = vadd.f32 %v1757, %v1772
    %v1785 = vadd.f32 %v1758, %v1772
    %v1786 = vadd.f32 %v1759, %v1772
    %v1787 = vadd.f32 %v1760, %v1772
    %v1788 = vadd.f32 %v1761, %v1777
    %v1789 = vadd.f32 %v1762, %v1777
    %v1790 = vadd.f32 %v1763, %v1777
    %v1791 = vadd.f32 %v1764, %v1777
    %v1792 = vadd.f32 %v1765, %v1782
    %v1793 = vadd.f32 %v1766, %v1782
    %v1794 = vadd.f32 %v1767, %v1782
    %v1795 = vadd.f32 %v1768, %v1782
    %v1796 = vmax.f32 %v1784, 0.0
    %v1797 = vmax.f32 %v1785, 0.0
    %v1798 = vmax.f32 %v1786, 0.0
    %v1799 = vmax.f32 %v1787, 0.0
    %v1800 = vmax.f32 %v1788, 0.0
    %v1801 = vmax.f32 %v1789, 0.0
    %v1802 = vmax.f32 %v1790, 0.0
    %v1803 = vmax.f32 %v1791, 0.0
    %v1804 = vmax.f32 %v1792, 0.0
    %v1805 = vmax.f32 %v1793, 0.0
    %v1806 = vmax.f32 %v1794, 0.0
    %v1807 = vmax.f32 %v1795, 0.0
    %v1808 = vmin.f32 %v1796, 6.0
    %v1809 = vmin.f32 %v1797, 6.0
    %v1810 = vmin.f32 %v1798, 6.0
    %v1811 = vmin.f32 %v1799, 6.0
    %v1812 = vmin.f32 %v1800, 6.0
    %v1813 = vmin.f32 %v1801, 6.0
    %v1814 = vmin.f32 %v1802, 6.0
    %v1815 = vmin.f32 %v1803, 6.0
    %v1816 = vmin.f32 %v1804, 6.0
    %v1817 = vmin.f32 %v1805, 6.0
    %v1818 = vmin.f32 %v1806, 6.0
    %v1819 = vmin.f32 %v1807, 6.0
    %v1820 = vld [vmem:[#allocation17] sm:$0xf]
    %vm1821 = vcmask 195584
    %v1823 = vsel %vm1821, %v1820, 0
    %1825 = vmatprep.subr.mxu0 %v1809
    %1826 = vmatpush1.msra.mxu0 %v1808
    %1827 = vmatprep.subr.mxu0 %v1813
    %1828 = vmatpush1.msra.mxu0 %v1812
    %1829 = vmatprep.subr.mxu0 %v1817
    %1830 = vmatpush1.msra.mxu0 %v1816
    %1831 = vmatprep.subr.mxu0 0.0
    %1832 = vmatpush1.msra.mxu0 0.0
    %1833 = vmatprep.subr.mxu0 0.0
    %1834 = vmatpush1.msra.mxu0 0.0
    %1835 = vmatprep.subr.mxu0 0.0
    %1836 = vmatpush1.msra.mxu0 0.0
    %1837 = vmatprep.subr.mxu0 0.0
    %1838 = vmatpush1.msra.mxu0 0.0
    %1839 = vmatprep.subr.mxu0 0.0
    %1840 = vmatpush1.msra.mxu0 0.0
    %1841 = vmatprep.subr.mxu0 0.0
    %1842 = vmatpush1.msra.mxu0 0.0
    %1843 = vmatprep.subr.mxu0 0.0
    %1844 = vmatpush1.msra.mxu0 0.0
    %1845 = vmatprep.subr.mxu0 0.0
    %1846 = vmatpush1.msra.mxu0 0.0
    %1847 = vmatprep.subr.mxu0 0.0
    %1848 = vmatpush1.msra.mxu0 0.0
    %1849 = vmatprep.subr.mxu0 0.0
    %1850 = vmatpush1.msra.mxu0 0.0
    %1851 = vmatprep.subr.mxu0 0.0
    %1852 = vmatpush1.msra.mxu0 0.0
    %1853 = vmatprep.subr.mxu0 0.0
    %1854 = vmatpush1.msra.mxu0 0.0
    %1855 = vmatprep.subr.mxu0 0.0
    %1856 = vmatpush1.msra.mxu0 0.0
    %1857 = vmatprep.subr.mxu0 0.0
    %1858 = vmatpush1.msra.mxu0 0.0
    %1859 = vmatprep.subr.mxu0 0.0
    %1860 = vmatpush1.msra.mxu0 0.0
    %1861 = vmatprep.subr.mxu0 0.0
    %1862 = vmatpush1.msra.mxu0 0.0
    %1863 = vmatprep.subr.mxu0 0.0
    %1864 = vmatpush1.msra.mxu0 0.0
    %1865 = vmatprep.subr.mxu0 0.0
    %1866 = vmatpush1.msra.mxu0 0.0
    %1867 = vmatprep.subr.mxu0 0.0
    %1868 = vmatpush1.msra.mxu0 0.0
    %1869 = vmatprep.subr.mxu0 0.0
    %1870 = vmatpush1.msra.mxu0 0.0
    %1871 = vmatprep.subr.mxu0 0.0
    %1872 = vmatpush1.msra.mxu0 0.0
    %1873 = vmatprep.subr.mxu0 0.0
    %1874 = vmatpush1.msra.mxu0 0.0
    %1875 = vmatprep.subr.mxu0 0.0
    %1876 = vmatpush1.msra.mxu0 0.0
    %1877 = vmatprep.subr.mxu0 0.0
    %1878 = vmatpush1.msra.mxu0 0.0
    %1879 = vmatprep.subr.mxu0 0.0
    %1880 = vmatpush1.msra.mxu0 0.0
    %1881 = vmatprep.subr.mxu0 0.0
    %1882 = vmatpush1.msra.mxu0 0.0
    %1883 = vmatprep.subr.mxu0 0.0
    %1884 = vmatpush1.msra.mxu0 0.0
    %1885 = vmatprep.subr.mxu0 0.0
    %1886 = vmatpush1.msra.mxu0 0.0
    %1887 = vmatprep.subr.mxu0 0.0
    %1888 = vmatpush1.msra.mxu0 0.0
    %1889 = vmatprep.mubr.f32.mxu0 0.0
    %1890 = vmatmul.mubr.f32.gmra.mrb[0].mxu0 %v1823
    %v1891 = vpop.f32.mrb[0].mxu0
    %v1892 = vadd.f32 0.0, %v1891
    %v1893 = vpop.f32.mrb[0].mxu0
    %v1894 = vadd.f32 0.0, %v1893
    %1895 = vdwg.mxu0
    %1896 = vmatprep.subr.mxu0 %v1811
    %1897 = vmatpush1.msra.mxu0 %v1810
    %1898 = vmatprep.subr.mxu0 %v1815
    %1899 = vmatpush1.msra.mxu0 %v1814
    %1900 = vmatprep.subr.mxu0 %v1819
    %1901 = vmatpush1.msra.mxu0 %v1818
    %1902 = vmatprep.subr.mxu0 0.0
    %1903 = vmatpush1.msra.mxu0 0.0
    %1904 = vmatprep.subr.mxu0 0.0
    %1905 = vmatpush1.msra.mxu0 0.0
    %1906 = vmatprep.subr.mxu0 0.0
    %1907 = vmatpush1.msra.mxu0 0.0
    %1908 = vmatprep.subr.mxu0 0.0
    %1909 = vmatpush1.msra.mxu0 0.0
    %1910 = vmatprep.subr.mxu0 0.0
    %1911 = vmatpush1.msra.mxu0 0.0
    %1912 = vmatprep.subr.mxu0 0.0
    %1913 = vmatpush1.msra.mxu0 0.0
    %1914 = vmatprep.subr.mxu0 0.0
    %1915 = vmatpush1.msra.mxu0 0.0
    %1916 = vmatprep.subr.mxu0 0.0
    %1917 = vmatpush1.msra.mxu0 0.0
    %1918 = vmatprep.subr.mxu0 0.0
    %1919 = vmatpush1.msra.mxu0 0.0
    %1920 = vmatprep.subr.mxu0 0.0
    %1921 = vmatpush1.msra.mxu0 0.0
    %1922 = vmatprep.subr.mxu0 0.0
    %1923 = vmatpush1.msra.mxu0 0.0
    %1924 = vmatprep.subr.mxu0 0.0
    %1925 = vmatpush1.msra.mxu0 0.0
    %1926 = vmatprep.subr.mxu0 0.0
    %1927 = vmatpush1.msra.mxu0 0.0
    %1928 = vmatprep.subr.mxu0 0.0
    %1929 = vmatpush1.msra.mxu0 0.0
    %1930 = vmatprep.subr.mxu0 0.0
    %1931 = vmatpush1.msra.mxu0 0.0
    %1932 = vmatprep.subr.mxu0 0.0
    %1933 = vmatpush1.msra.mxu0 0.0
    %1934 = vmatprep.subr.mxu0 0.0
    %1935 = vmatpush1.msra.mxu0 0.0
    %1936 = vmatprep.subr.mxu0 0.0
    %1937 = vmatpush1.msra.mxu0 0.0
    %1938 = vmatprep.subr.mxu0 0.0
    %1939 = vmatpush1.msra.mxu0 0.0
    %1940 = vmatprep.subr.mxu0 0.0
    %1941 = vmatpush1.msra.mxu0 0.0
    %1942 = vmatprep.subr.mxu0 0.0
    %1943 = vmatpush1.msra.mxu0 0.0
    %1944 = vmatprep.subr.mxu0 0.0
    %1945 = vmatpush1.msra.mxu0 0.0
    %1946 = vmatprep.subr.mxu0 0.0
    %1947 = vmatpush1.msra.mxu0 0.0
    %1948 = vmatprep.subr.mxu0 0.0
    %1949 = vmatpush1.msra.mxu0 0.0
    %1950 = vmatprep.subr.mxu0 0.0
    %1951 = vmatpush1.msra.mxu0 0.0
    %1952 = vmatprep.subr.mxu0 0.0
    %1953 = vmatpush1.msra.mxu0 0.0
    %1954 = vmatprep.subr.mxu0 0.0
    %1955 = vmatpush1.msra.mxu0 0.0
    %1956 = vmatprep.subr.mxu0 0.0
    %1957 = vmatpush1.msra.mxu0 0.0
    %1958 = vmatprep.subr.mxu0 0.0
    %1959 = vmatpush1.msra.mxu0 0.0
    %1960 = vmatprep.mubr.f32.mxu0 0.0
    %1961 = vmatmul.mubr.f32.gmra.mrb[0].mxu0 %v1823
    %v1962 = vpop.f32.mrb[0].mxu0
    %v1963 = vadd.f32 0.0, %v1962
    %v1964 = vpop.f32.mrb[0].mxu0
    %v1965 = vadd.f32 0.0, %v1964
    %1966 = vdwg.mxu0
    %v1967 = vld [vmem:[#allocation18] sm:$0xf]
    %v1968 = vld [vmem:[#allocation20] sm:$0xf]
    %vm1969 = vcmask 1043456
    %v1970 = vsel %vm1969, %v1892, 0.0
    %v1971 = vsel %vm1969, %v1894, 0.0
    %v1972 = vadd.f32 %v1970, %v1971
    %v1973 = vsel %vm1969, %v1963, 0.0
    %v1974 = vadd.f32 %v1972, %v1973
    %v1975 = vsel %vm1969, %v1965, 0.0
    %v1976 = vadd.f32 %v1974, %v1975
    %1977 = vadd.xlane.f32.xlu0 %v1976
    %v1978 = vpop.xlane.xlu0 %1977
    %v1979 = vmul.f32 %v1978, 0.001953125
    %v1980 = vsub.f32 %v1892, %v1979
    %v1981 = vsub.f32 %v1894, %v1979
    %v1982 = vsub.f32 %v1963, %v1979
    %v1983 = vsub.f32 %v1965, %v1979
    %v1984 = vmul.f32 %v1980, %v1980
    %v1985 = vmul.f32 %v1981, %v1981
    %v1986 = vmul.f32 %v1982, %v1982
    %v1987 = vmul.f32 %v1983, %v1983
    %v1988 = vsel %vm1969, %v1984, 0.0
    %v1989 = vsel %vm1969, %v1985, 0.0
    %v1990 = vadd.f32 %v1988, %v1989
    %v1991 = vsel %vm1969, %v1986, 0.0
    %v1992 = vadd.f32 %v1990, %v1991
    %v1993 = vsel %vm1969, %v1987, 0.0
    %v1994 = vadd.f32 %v1992, %v1993
    %1995 = vadd.xlane.f32.xlu0 %v1994
    %v1996 = vpop.xlane.xlu0 %1995
    %v1997 = vmul.f32 %v1996, 0.001953125
    %v1998 = vadd.f32 %v1997, 1e-05
    %v1999 = vrsqrt.pop %v1998
    %v2000 = vmul.f32 %v1967, %v1999
    %2002 = vset.pattern.permute.xlu0 0
    %2003 = vperm.xlu0 %2002, %v2000
    %v2004 = vpop.permute.xlu0 %2003
    %v2006 = vmul.f32 %v1980, %v2004
    %v2007 = vmul.f32 %v1981, %v2004
    %v2008 = vmul.f32 %v1982, %v2004
    %v2009 = vmul.f32 %v1983, %v2004
    %2011 = vset.pattern.permute.xlu0 0
    %2012 = vperm.xlu0 %2011, %v1968
    %v2013 = vpop.permute.xlu0 %2012
    %v2015 = vadd.f32 %v2006, %v2013
    %v2016 = vadd.f32 %v2007, %v2013
    %v2017 = vadd.f32 %v2008, %v2013
    %v2018 = vadd.f32 %v2009, %v2013
    %v2019 = vld [vmem:[#allocation3] sm:$0xff]
    %v2021 = vcombine.high %v2019, %v2019
    %v2023 = vadd.f32 %v2015, %v2019
    %v2024 = vadd.f32 %v2016, %v2021
    %v2027 = vcombine.low %v2023, %v2024
    %2029 = vst [vmem:[#allocation21] sm:$0xff] %v2027
    %v2030 = vld [vmem:[%s181] sm:$0xff]
    %v2032 = vcombine.high %v2030, %v2030
    %v2034 = vadd.f32 %v2017, %v2030
    %v2035 = vadd.f32 %v2018, %v2032
    %v2038 = vcombine.low %v2034, %v2035
    %s2040 = scalar_lea.vmem [#allocation21], 8
    %2041 = vst [vmem:[%s2040] sm:$0xff] %v2038
    // Predicated region
    $region90: #{tpu_custom_call.1} parent=1 // pred_check
      _
    $region91: #{tpu_custom_call.1} parent=1 // pred_check_branch
      %2043 = sbr.rel (0) target = $region93
    $region92: #{tpu_custom_call.1} parent=1 // pred_region
      %s2045 = ssub.s32 256, 256
      %2046 = vsyncadd [#allocation5], %s2045
      %s2047 = sshll.u32 [#allocation21], 4
      %s2048 = int_to_ptr.vmem [resolvable:$true] %s2047
      %2053 = dma.vmem_to_hbm [thread:$0]  %s2048, 256, %s11, [#allocation5], 128, 128, 8
    $region93: #{tpu_custom_call.1} parent=1 // pred_fallthru
      _
    // Predicated region
    $region94: #{tpu_custom_call.1} parent=1 // pred_check
      _
    $region95: #{tpu_custom_call.1} parent=1 // pred_check_branch
      %2055 = sbr.rel (0) target = $region97
    $region96: #{tpu_custom_call.1} parent=1 // pred_region
      %2056 = dma.done [#allocation5], 256
    $region97: #{tpu_custom_call.1} parent=1 // pred_fallthru
      _
    %2057 = vsyncpa [#allocation4], 1
    %2058 = vsyncpa [#allocation7], 1
    %2059 = vsyncpa [#allocation10], 1
    %2060 = vsyncpa [#allocation13], 1
    %2061 = vsyncpa [#allocation16], 1
    %2062 = vsyncpa [#allocation19], 1
    %2063 = vsyncpa [#allocation5], 1

</llo_original>
